<compile_context>
chip_gen: v7x
topology: tpu7x:2x2x1
jax: 0.10.0
libtpu: 0.0.40
codegen_flags: <defaults>
</compile_context>

<pallas_src>
import functools
import math

import jax
import jax.numpy as jnp
from jax import lax
from jax.experimental import pallas as pl
from jax.experimental.pallas import tpu as pltpu

HIDDEN = 32          # cfg.hidden_size
HEADS = 4            # cfg.num_heads
HEAD_DIM = HIDDEN // HEADS
LN_EPS = 1e-5        # torch.nn.LayerNorm default
MASK_BIG = 1e10      # matches the 10000000000.0 in the PyTorch code
TB_MAX = 64          # batch elements per grid step (sweep per chip if needed)


def _point_sa_kernel(q_ref, k_ref, mask_ref,
                     wq_ref, bq_ref, wkv_ref, bkv_ref,
                     wd_ref, bd_ref, gamma_ref, beta_ref,
                     out_ref, *, tb, lq, lk):
    C = HIDDEN
    D = HEAD_DIM

    qs = q_ref[...]                                   # (TB*Lq, C)
    ks = k_ref[...]                                   # (TB*Lk, C)

    # Projections as single big matmuls.  Wq/bq are pre-scaled by 1/sqrt(D)
    # on the host; K and V weights arrive packed as one (C, 2C) matrix.
    Q = jnp.dot(qs, wq_ref[...], preferred_element_type=jnp.float32) + bq_ref[...]
    KV = jnp.dot(ks, wkv_ref[...], preferred_element_type=jnp.float32) + bkv_ref[...]

    Q3 = Q.reshape(tb, lq, C)                         # leading-dim split only
    K3 = KV[:, :C].reshape(tb, lk, C)
    V3 = KV[:, C:].reshape(tb, lk, C)

    # Additive mask penalty (mask is applied BEFORE the 1/sqrt(D) scaling in
    # the reference module, so the penalty is pre-scaled by the same factor).
    neg = (1.0 - mask_ref[...]) * (MASK_BIG / math.sqrt(D))   # (TB, Lk)
    neg = neg[:, None, :]                                     # (TB, 1, Lk)

    wd = wd_ref[...]                                          # (C, C)

    # Per-head attention (static unroll over 4 heads), batched over TB, with
    # the output projection fused in -> no ctx scratch, no width-8 VMEM stores.
    dense = jnp.zeros((tb * lq, C), jnp.float32)
    for h in range(HEADS):
        lo = h * D
        qh = Q3[:, :, lo:lo + D]                              # (TB, Lq, D)
        kh = K3[:, :, lo:lo + D]                              # (TB, Lk, D)
        vh = V3[:, :, lo:lo + D]                              # (TB, Lk, D)

        s = jnp.einsum('bqd,bkd->bqk', qh, kh,
                       preferred_element_type=jnp.float32)    # (TB, Lq, Lk)
        s = s - neg
        s = s - jnp.max(s, axis=-1, keepdims=True)
        p = jnp.exp(s)
        p = p * pl.reciprocal(jnp.sum(p, axis=-1, keepdims=True), approx=True)

        ctx = jnp.einsum('bqk,bkd->bqd', p, vh,
                         preferred_element_type=jnp.float32)  # (TB, Lq, D)
        dense = dense + jnp.dot(ctx.reshape(tb * lq, D), wd[lo:lo + D, :],
                                preferred_element_type=jnp.float32)

    # Residual + LayerNorm, all on the flat (TB*Lq, C) slab.
    x = dense + bd_ref[...] + qs
    mu = jnp.mean(x, axis=-1, keepdims=True)
    var = jnp.mean(jnp.square(x - mu), axis=-1, keepdims=True)
    y = (x - mu) * lax.rsqrt(var + LN_EPS)
    out_ref[...] = y * gamma_ref[...] + beta_ref[...]


def point_self_attention(query_states, key_states, attn_mask, params,
                         *, tb_max=TB_MAX):
    """query_states (B, N+M, C), key_states (B, N, C), attn_mask bool (B, N)."""
    B, Lq, C = query_states.shape
    _, Lk, _ = key_states.shape
    assert C == HIDDEN

    wq, bq, wk, bk, wv, bv, wd, bd, gamma, beta = params

    # Fold 1/sqrt(head_dim) into the query projection; pack K|V weights.
    inv_sqrt_d = 1.0 / math.sqrt(HEAD_DIM)
    wq_s = wq * inv_sqrt_d
    bq_s = bq * inv_sqrt_d
    wkv = jnp.concatenate([wk, wv], axis=1)     # (C, 2C)
    bkv = jnp.concatenate([bk, bv], axis=1)     # (1, 2C)

    # Batch tiling: TB batch elements per grid step; pad B if needed.
    TB = min(tb_max, B)
    nb = -(-B // TB)
    Bp = nb * TB
    mask_f = attn_mask.astype(jnp.float32)
    if Bp != B:
        pad = Bp - B
        query_states = jnp.pad(query_states, ((0, pad), (0, 0), (0, 0)))
        key_states = jnp.pad(key_states, ((0, pad), (0, 0), (0, 0)))
        mask_f = jnp.pad(mask_f, ((0, pad), (0, 0)))

    # Flat 2-D token slabs (free reshapes: leading-dim merges only).
    q2 = query_states.reshape(Bp * Lq, C)
    k2 = key_states.reshape(Bp * Lk, C)

    kernel = functools.partial(_point_sa_kernel, tb=TB, lq=Lq, lk=Lk)

    def full(r, c):
        return pl.BlockSpec((r, c), lambda b: (0, 0))

    grid_spec = pltpu.PrefetchScalarGridSpec(
        num_scalar_prefetch=0,
        grid=(nb,),
        in_specs=[
            pl.BlockSpec((TB * Lq, C), lambda b: (b, 0)),   # query tokens
            pl.BlockSpec((TB * Lk, C), lambda b: (b, 0)),   # key tokens
            pl.BlockSpec((TB, Lk), lambda b: (b, 0)),       # attn mask (float)
            full(C, C), full(1, C),                         # Wq (pre-scaled), bq
            full(C, 2 * C), full(1, 2 * C),                 # packed Wkv, bkv
            full(C, C), full(1, C),                         # Wdense, bdense
            full(1, C), full(1, C),                         # LN gamma, beta
        ],
        out_specs=pl.BlockSpec((TB * Lq, C), lambda b: (b, 0)),
    )

    out = pl.pallas_call(
        kernel,
        out_shape=jax.ShapeDtypeStruct((Bp * Lq, C), jnp.float32),
        grid_spec=grid_spec,
        compiler_params=pltpu.CompilerParams(
            dimension_semantics=("parallel",)),
    )(q2, k2, mask_f, wq_s, bq_s, wkv, bkv, wd, bd, gamma, beta)

    return out.reshape(Bp, Lq, C)[:B]


def reference(query_states, key_states, attn_mask, params):
    """Pure-JAX port of the PyTorch forward (dropout = identity)."""
    wq, bq, wk, bk, wv, bv, wd, bd, gamma, beta = params
    V = key_states @ wv + bv
    Q = query_states @ wq + bq
    K = key_states @ wk + bk

    def split(x):
        B, L, C = x.shape
        return x.reshape(B, L, HEADS, HEAD_DIM).transpose(0, 2, 1, 3)

    Qh, Kh, Vh = split(Q), split(K), split(V)
    s = jnp.einsum('bhqd,bhkd->bhqk', Qh, Kh)
    neg = (1.0 - attn_mask.astype(jnp.float32)) * MASK_BIG
    s = s - neg[:, None, None, :]
    p = jax.nn.softmax(s / math.sqrt(HEAD_DIM), axis=-1)
    ctx = jnp.einsum('bhqk,bhkd->bhqd', p, Vh)
    ctx = ctx.transpose(0, 2, 1, 3).reshape(query_states.shape)
    x = ctx @ wd + bd + query_states
    mu = x.mean(-1, keepdims=True)
    var = ((x - mu) ** 2).mean(-1, keepdims=True)
    return (x - mu) / jnp.sqrt(var + LN_EPS) * gamma + beta


if __name__ == "__main__":
    key = jax.random.PRNGKey(0)
    B, N, M = 2, 8, 8
    Lq, Lk, C = N + M, N, HIDDEN
    ks = jax.random.split(key, 12)

    query_states = jax.random.normal(ks[0], (B, Lq, C), jnp.float32)
    key_states = jax.random.normal(ks[1], (B, Lk, C), jnp.float32)
    lengths = jnp.array([6, 3])
    attn_mask = jnp.arange(Lk)[None, :] < lengths[:, None]      # bool (B, N)

    def w(k, shape, scale=0.1):
        return scale * jax.random.normal(k, shape, jnp.float32)

    params = (
        w(ks[2], (C, C)), w(ks[3], (1, C)),        # query proj
        w(ks[4], (C, C)), w(ks[5], (1, C)),        # key proj
        w(ks[6], (C, C)), w(ks[7], (1, C)),        # value proj
        w(ks[8], (C, C)), w(ks[9], (1, C)),        # dense proj
        1.0 + w(ks[10], (1, C), 0.05),             # LayerNorm gamma
        w(ks[11], (1, C), 0.05),                   # LayerNorm beta
    )

    out = point_self_attention(query_states, key_states, attn_mask, params)
    out = jax.block_until_ready(out)

    ref = reference(query_states, key_states, attn_mask, params)
    assert out.shape == (B, Lq, C)
    err = float(jnp.max(jnp.abs(out - ref)))
    assert jnp.allclose(out, ref, rtol=2e-3, atol=2e-3), err
    print("KERNEL_OK")
</pallas_src>

<mosaic_0001>
module attributes {stable_mosaic.version = 11 : i64} {
  func.func @_point_sa_kernel(%arg0: i32, %arg1: memref<32x32xf32, #tpu.memory_space<vmem>>, %arg2: memref<16x32xf32, #tpu.memory_space<vmem>>, %arg3: memref<2x8xf32, #tpu.memory_space<vmem>>, %arg4: memref<32x32xf32, #tpu.memory_space<vmem>>, %arg5: memref<1x32xf32, #tpu.memory_space<vmem>>, %arg6: memref<32x64xf32, #tpu.memory_space<vmem>>, %arg7: memref<1x64xf32, #tpu.memory_space<vmem>>, %arg8: memref<32x32xf32, #tpu.memory_space<vmem>>, %arg9: memref<1x32xf32, #tpu.memory_space<vmem>>, %arg10: memref<1x32xf32, #tpu.memory_space<vmem>>, %arg11: memref<1x32xf32, #tpu.memory_space<vmem>>, %arg12: memref<32x32xf32, #tpu.memory_space<vmem>>) attributes {dimension_semantics = [#tpu.dimension_semantics<parallel>], iteration_bounds = array<i64: 1>, scalar_prefetch = 0 : i64, scratch_operands = 0 : i64, tpu.core_type = #tpu.core_type<tc>, window_params = [{transform_indices = @transform_0, window_bounds = array<i64: 32, 32>}, {transform_indices = @transform_1, window_bounds = array<i64: 16, 32>}, {transform_indices = @transform_2, window_bounds = array<i64: 2, 8>}, {pipeline_mode = #tpu.pipeline_mode<synchronous>, transform_indices = @transform_3, window_bounds = array<i64: 32, 32>}, {pipeline_mode = #tpu.pipeline_mode<synchronous>, transform_indices = @transform_4, window_bounds = array<i64: 1, 32>}, {pipeline_mode = #tpu.pipeline_mode<synchronous>, transform_indices = @transform_5, window_bounds = array<i64: 32, 64>}, {pipeline_mode = #tpu.pipeline_mode<synchronous>, transform_indices = @transform_6, window_bounds = array<i64: 1, 64>}, {pipeline_mode = #tpu.pipeline_mode<synchronous>, transform_indices = @transform_7, window_bounds = array<i64: 32, 32>}, {pipeline_mode = #tpu.pipeline_mode<synchronous>, transform_indices = @transform_8, window_bounds = array<i64: 1, 32>}, {pipeline_mode = #tpu.pipeline_mode<synchronous>, transform_indices = @transform_9, window_bounds = array<i64: 1, 32>}, {pipeline_mode = #tpu.pipeline_mode<synchronous>, transform_indices = @transform_10, window_bounds = array<i64: 1, 32>}, {transform_indices = @transform_11, window_bounds = array<i64: 32, 32>}]} {
    %c0 = arith.constant 0 : index
    %c0_0 = arith.constant 0 : index
    %0 = vector.load %arg1[%c0, %c0_0] : memref<32x32xf32, #tpu.memory_space<vmem>>, vector<32x32xf32>
    %c0_1 = arith.constant 0 : index
    %c0_2 = arith.constant 0 : index
    %1 = vector.load %arg2[%c0_1, %c0_2] : memref<16x32xf32, #tpu.memory_space<vmem>>, vector<16x32xf32>
    %c0_3 = arith.constant 0 : index
    %c0_4 = arith.constant 0 : index
    %2 = vector.load %arg4[%c0_3, %c0_4] : memref<32x32xf32, #tpu.memory_space<vmem>>, vector<32x32xf32>
    %cst = arith.constant dense<0.000000e+00> : vector<32x32xf32>
    %3 = tpu.matmul %0, %2, %cst {dimension_numbers = #tpu.dot_dimension_numbers<[1], [0], [0], [1], [0, 0, 1, 1], [], []>} : vector<32x32xf32>, vector<32x32xf32>, vector<32x32xf32> -> vector<32x32xf32>
    %c0_5 = arith.constant 0 : index
    %c0_6 = arith.constant 0 : index
    %4 = vector.load %arg5[%c0_5, %c0_6] : memref<1x32xf32, #tpu.memory_space<vmem>>, vector<1x32xf32>
    %5 = vector.broadcast %4 : vector<1x32xf32> to vector<32x32xf32>
    %6 = arith.addf %3, %5 : vector<32x32xf32>
    %c0_7 = arith.constant 0 : index
    %c0_8 = arith.constant 0 : index
    %7 = vector.load %arg6[%c0_7, %c0_8] : memref<32x64xf32, #tpu.memory_space<vmem>>, vector<32x64xf32>
    %cst_9 = arith.constant dense<0.000000e+00> : vector<16x64xf32>
    %8 = tpu.matmul %1, %7, %cst_9 {dimension_numbers = #tpu.dot_dimension_numbers<[1], [0], [0], [1], [0, 0, 1, 1], [], []>} : vector<16x32xf32>, vector<32x64xf32>, vector<16x64xf32> -> vector<16x64xf32>
    %c0_10 = arith.constant 0 : index
    %c0_11 = arith.constant 0 : index
    %9 = vector.load %arg7[%c0_10, %c0_11] : memref<1x64xf32, #tpu.memory_space<vmem>>, vector<1x64xf32>
    %10 = vector.broadcast %9 : vector<1x64xf32> to vector<16x64xf32>
    %11 = arith.addf %8, %10 : vector<16x64xf32>
    %12 = vector.shape_cast %6 : vector<32x32xf32> to vector<2x16x32xf32>
    %13 = vector.extract_strided_slice %11 {offsets = [0, 0], sizes = [16, 32], strides = [1, 1]} : vector<16x64xf32> to vector<16x32xf32>
    %14 = vector.shape_cast %13 : vector<16x32xf32> to vector<2x8x32xf32>
    %15 = vector.extract_strided_slice %11 {offsets = [0, 32], sizes = [16, 32], strides = [1, 1]} : vector<16x64xf32> to vector<16x32xf32>
    %16 = vector.shape_cast %15 : vector<16x32xf32> to vector<2x8x32xf32>
    %c0_12 = arith.constant 0 : index
    %c0_13 = arith.constant 0 : index
    %17 = vector.load %arg3[%c0_12, %c0_13] : memref<2x8xf32, #tpu.memory_space<vmem>>, vector<2x8xf32>
    %cst_14 = arith.constant 1.000000e+00 : f32
    %18 = vector.broadcast %cst_14 : f32 to vector<2x8xf32>
    %19 = arith.subf %18, %17 : vector<2x8xf32>
    %cst_15 = arith.constant 3.53553382E+9 : f32
    %20 = vector.broadcast %cst_15 : f32 to vector<2x8xf32>
    %21 = arith.mulf %19, %20 : vector<2x8xf32>
    %22 = vector.shape_cast %21 : vector<2x8xf32> to vector<2x1x8xf32>
    %c0_16 = arith.constant 0 : index
    %c0_17 = arith.constant 0 : index
    %23 = vector.load %arg8[%c0_16, %c0_17] : memref<32x32xf32, #tpu.memory_space<vmem>>, vector<32x32xf32>
    %cst_18 = arith.constant 0.000000e+00 : f32
    %24 = vector.broadcast %cst_18 : f32 to vector<32x32xf32>
    %25 = vector.extract_strided_slice %12 {offsets = [0, 0, 0], sizes = [2, 16, 8], strides = [1, 1, 1]} : vector<2x16x32xf32> to vector<2x16x8xf32>
    %26 = vector.extract_strided_slice %14 {offsets = [0, 0, 0], sizes = [2, 8, 8], strides = [1, 1, 1]} : vector<2x8x32xf32> to vector<2x8x8xf32>
    %27 = vector.extract_strided_slice %16 {offsets = [0, 0, 0], sizes = [2, 8, 8], strides = [1, 1, 1]} : vector<2x8x32xf32> to vector<2x8x8xf32>
    "tpu.trace_start"() <{level = 10 : i32, message = "bqd,bkd->bqk"}> : () -> ()
    %cst_19 = arith.constant dense<0.000000e+00> : vector<2x16x8xf32>
    %28 = tpu.matmul %25, %26, %cst_19 {dimension_numbers = #tpu.dot_dimension_numbers<[2], [2], [1], [1], [0, 0, 0, 1, 1, 1], [0], [0]>} : vector<2x16x8xf32>, vector<2x8x8xf32>, vector<2x16x8xf32> -> vector<2x16x8xf32>
    "tpu.trace_stop"() : () -> ()
    %29 = vector.broadcast %22 : vector<2x1x8xf32> to vector<2x16x8xf32>
    %30 = arith.subf %28, %29 : vector<2x16x8xf32>
    %cst_20 = arith.constant dense<0xFF800000> : vector<2x16xf32>
    %31 = vector.multi_reduction <maximumf>, %30, %cst_20 [2] : vector<2x16x8xf32> to vector<2x16xf32>
    %32 = vector.shape_cast %31 : vector<2x16xf32> to vector<2x16x1xf32>
    %33 = vector.broadcast %32 : vector<2x16x1xf32> to vector<2x16x8xf32>
    %34 = arith.subf %30, %33 : vector<2x16x8xf32>
    %35 = math.exp %34 : vector<2x16x8xf32>
    %cst_21 = arith.constant dense<0.000000e+00> : vector<2x16xf32>
    %36 = vector.multi_reduction <add>, %35, %cst_21 [2] : vector<2x16x8xf32> to vector<2x16xf32>
    %37 = vector.shape_cast %36 : vector<2x16xf32> to vector<2x16x1xf32>
    %38 = tpu.reciprocal %37 {approx = true} : vector<2x16x1xf32> -> vector<2x16x1xf32>
    %39 = vector.broadcast %38 : vector<2x16x1xf32> to vector<2x16x8xf32>
    %40 = arith.mulf %35, %39 : vector<2x16x8xf32>
    "tpu.trace_start"() <{level = 10 : i32, message = "bqk,bkd->bqd"}> : () -> ()
    %cst_22 = arith.constant dense<0.000000e+00> : vector<2x16x8xf32>
    %41 = tpu.matmul %40, %27, %cst_22 {dimension_numbers = #tpu.dot_dimension_numbers<[2], [1], [1], [2], [0, 0, 0, 1, 1, 2], [0], [0]>} : vector<2x16x8xf32>, vector<2x8x8xf32>, vector<2x16x8xf32> -> vector<2x16x8xf32>
    "tpu.trace_stop"() : () -> ()
    %42 = vector.shape_cast %41 : vector<2x16x8xf32> to vector<32x8xf32>
    %43 = vector.extract_strided_slice %23 {offsets = [0, 0], sizes = [8, 32], strides = [1, 1]} : vector<32x32xf32> to vector<8x32xf32>
    %cst_23 = arith.constant dense<0.000000e+00> : vector<32x32xf32>
    %44 = tpu.matmul %42, %43, %cst_23 {dimension_numbers = #tpu.dot_dimension_numbers<[1], [0], [0], [1], [0, 0, 1, 1], [], []>} : vector<32x8xf32>, vector<8x32xf32>, vector<32x32xf32> -> vector<32x32xf32>
    %45 = arith.addf %24, %44 : vector<32x32xf32>
    %46 = vector.extract_strided_slice %12 {offsets = [0, 0, 8], sizes = [2, 16, 8], strides = [1, 1, 1]} : vector<2x16x32xf32> to vector<2x16x8xf32>
    %47 = vector.extract_strided_slice %14 {offsets = [0, 0, 8], sizes = [2, 8, 8], strides = [1, 1, 1]} : vector<2x8x32xf32> to vector<2x8x8xf32>
    %48 = vector.extract_strided_slice %16 {offsets = [0, 0, 8], sizes = [2, 8, 8], strides = [1, 1, 1]} : vector<2x8x32xf32> to vector<2x8x8xf32>
    "tpu.trace_start"() <{level = 10 : i32, message = "bqd,bkd->bqk"}> : () -> ()
    %cst_24 = arith.constant dense<0.000000e+00> : vector<2x16x8xf32>
    %49 = tpu.matmul %46, %47, %cst_24 {dimension_numbers = #tpu.dot_dimension_numbers<[2], [2], [1], [1], [0, 0, 0, 1, 1, 1], [0], [0]>} : vector<2x16x8xf32>, vector<2x8x8xf32>, vector<2x16x8xf32> -> vector<2x16x8xf32>
    "tpu.trace_stop"() : () -> ()
    %50 = vector.broadcast %22 : vector<2x1x8xf32> to vector<2x16x8xf32>
    %51 = arith.subf %49, %50 : vector<2x16x8xf32>
    %cst_25 = arith.constant dense<0xFF800000> : vector<2x16xf32>
    %52 = vector.multi_reduction <maximumf>, %51, %cst_25 [2] : vector<2x16x8xf32> to vector<2x16xf32>
    %53 = vector.shape_cast %52 : vector<2x16xf32> to vector<2x16x1xf32>
    %54 = vector.broadcast %53 : vector<2x16x1xf32> to vector<2x16x8xf32>
    %55 = arith.subf %51, %54 : vector<2x16x8xf32>
    %56 = math.exp %55 : vector<2x16x8xf32>
    %cst_26 = arith.constant dense<0.000000e+00> : vector<2x16xf32>
    %57 = vector.multi_reduction <add>, %56, %cst_26 [2] : vector<2x16x8xf32> to vector<2x16xf32>
    %58 = vector.shape_cast %57 : vector<2x16xf32> to vector<2x16x1xf32>
    %59 = tpu.reciprocal %58 {approx = true} : vector<2x16x1xf32> -> vector<2x16x1xf32>
    %60 = vector.broadcast %59 : vector<2x16x1xf32> to vector<2x16x8xf32>
    %61 = arith.mulf %56, %60 : vector<2x16x8xf32>
    "tpu.trace_start"() <{level = 10 : i32, message = "bqk,bkd->bqd"}> : () -> ()
    %cst_27 = arith.constant dense<0.000000e+00> : vector<2x16x8xf32>
    %62 = tpu.matmul %61, %48, %cst_27 {dimension_numbers = #tpu.dot_dimension_numbers<[2], [1], [1], [2], [0, 0, 0, 1, 1, 2], [0], [0]>} : vector<2x16x8xf32>, vector<2x8x8xf32>, vector<2x16x8xf32> -> vector<2x16x8xf32>
    "tpu.trace_stop"() : () -> ()
    %63 = vector.shape_cast %62 : vector<2x16x8xf32> to vector<32x8xf32>
    %64 = vector.extract_strided_slice %23 {offsets = [8, 0], sizes = [8, 32], strides = [1, 1]} : vector<32x32xf32> to vector<8x32xf32>
    %cst_28 = arith.constant dense<0.000000e+00> : vector<32x32xf32>
    %65 = tpu.matmul %63, %64, %cst_28 {dimension_numbers = #tpu.dot_dimension_numbers<[1], [0], [0], [1], [0, 0, 1, 1], [], []>} : vector<32x8xf32>, vector<8x32xf32>, vector<32x32xf32> -> vector<32x32xf32>
    %66 = arith.addf %45, %65 : vector<32x32xf32>
    %67 = vector.extract_strided_slice %12 {offsets = [0, 0, 16], sizes = [2, 16, 8], strides = [1, 1, 1]} : vector<2x16x32xf32> to vector<2x16x8xf32>
    %68 = vector.extract_strided_slice %14 {offsets = [0, 0, 16], sizes = [2, 8, 8], strides = [1, 1, 1]} : vector<2x8x32xf32> to vector<2x8x8xf32>
    %69 = vector.extract_strided_slice %16 {offsets = [0, 0, 16], sizes = [2, 8, 8], strides = [1, 1, 1]} : vector<2x8x32xf32> to vector<2x8x8xf32>
    "tpu.trace_start"() <{level = 10 : i32, message = "bqd,bkd->bqk"}> : () -> ()
    %cst_29 = arith.constant dense<0.000000e+00> : vector<2x16x8xf32>
    %70 = tpu.matmul %67, %68, %cst_29 {dimension_numbers = #tpu.dot_dimension_numbers<[2], [2], [1], [1], [0, 0, 0, 1, 1, 1], [0], [0]>} : vector<2x16x8xf32>, vector<2x8x8xf32>, vector<2x16x8xf32> -> vector<2x16x8xf32>
    "tpu.trace_stop"() : () -> ()
    %71 = vector.broadcast %22 : vector<2x1x8xf32> to vector<2x16x8xf32>
    %72 = arith.subf %70, %71 : vector<2x16x8xf32>
    %cst_30 = arith.constant dense<0xFF800000> : vector<2x16xf32>
    %73 = vector.multi_reduction <maximumf>, %72, %cst_30 [2] : vector<2x16x8xf32> to vector<2x16xf32>
    %74 = vector.shape_cast %73 : vector<2x16xf32> to vector<2x16x1xf32>
    %75 = vector.broadcast %74 : vector<2x16x1xf32> to vector<2x16x8xf32>
    %76 = arith.subf %72, %75 : vector<2x16x8xf32>
    %77 = math.exp %76 : vector<2x16x8xf32>
    %cst_31 = arith.constant dense<0.000000e+00> : vector<2x16xf32>
    %78 = vector.multi_reduction <add>, %77, %cst_31 [2] : vector<2x16x8xf32> to vector<2x16xf32>
    %79 = vector.shape_cast %78 : vector<2x16xf32> to vector<2x16x1xf32>
    %80 = tpu.reciprocal %79 {approx = true} : vector<2x16x1xf32> -> vector<2x16x1xf32>
    %81 = vector.broadcast %80 : vector<2x16x1xf32> to vector<2x16x8xf32>
    %82 = arith.mulf %77, %81 : vector<2x16x8xf32>
    "tpu.trace_start"() <{level = 10 : i32, message = "bqk,bkd->bqd"}> : () -> ()
    %cst_32 = arith.constant dense<0.000000e+00> : vector<2x16x8xf32>
    %83 = tpu.matmul %82, %69, %cst_32 {dimension_numbers = #tpu.dot_dimension_numbers<[2], [1], [1], [2], [0, 0, 0, 1, 1, 2], [0], [0]>} : vector<2x16x8xf32>, vector<2x8x8xf32>, vector<2x16x8xf32> -> vector<2x16x8xf32>
    "tpu.trace_stop"() : () -> ()
    %84 = vector.shape_cast %83 : vector<2x16x8xf32> to vector<32x8xf32>
    %85 = vector.extract_strided_slice %23 {offsets = [16, 0], sizes = [8, 32], strides = [1, 1]} : vector<32x32xf32> to vector<8x32xf32>
    %cst_33 = arith.constant dense<0.000000e+00> : vector<32x32xf32>
    %86 = tpu.matmul %84, %85, %cst_33 {dimension_numbers = #tpu.dot_dimension_numbers<[1], [0], [0], [1], [0, 0, 1, 1], [], []>} : vector<32x8xf32>, vector<8x32xf32>, vector<32x32xf32> -> vector<32x32xf32>
    %87 = arith.addf %66, %86 : vector<32x32xf32>
    %88 = vector.extract_strided_slice %12 {offsets = [0, 0, 24], sizes = [2, 16, 8], strides = [1, 1, 1]} : vector<2x16x32xf32> to vector<2x16x8xf32>
    %89 = vector.extract_strided_slice %14 {offsets = [0, 0, 24], sizes = [2, 8, 8], strides = [1, 1, 1]} : vector<2x8x32xf32> to vector<2x8x8xf32>
    %90 = vector.extract_strided_slice %16 {offsets = [0, 0, 24], sizes = [2, 8, 8], strides = [1, 1, 1]} : vector<2x8x32xf32> to vector<2x8x8xf32>
    "tpu.trace_start"() <{level = 10 : i32, message = "bqd,bkd->bqk"}> : () -> ()
    %cst_34 = arith.constant dense<0.000000e+00> : vector<2x16x8xf32>
    %91 = tpu.matmul %88, %89, %cst_34 {dimension_numbers = #tpu.dot_dimension_numbers<[2], [2], [1], [1], [0, 0, 0, 1, 1, 1], [0], [0]>} : vector<2x16x8xf32>, vector<2x8x8xf32>, vector<2x16x8xf32> -> vector<2x16x8xf32>
    "tpu.trace_stop"() : () -> ()
    %92 = vector.broadcast %22 : vector<2x1x8xf32> to vector<2x16x8xf32>
    %93 = arith.subf %91, %92 : vector<2x16x8xf32>
    %cst_35 = arith.constant dense<0xFF800000> : vector<2x16xf32>
    %94 = vector.multi_reduction <maximumf>, %93, %cst_35 [2] : vector<2x16x8xf32> to vector<2x16xf32>
    %95 = vector.shape_cast %94 : vector<2x16xf32> to vector<2x16x1xf32>
    %96 = vector.broadcast %95 : vector<2x16x1xf32> to vector<2x16x8xf32>
    %97 = arith.subf %93, %96 : vector<2x16x8xf32>
    %98 = math.exp %97 : vector<2x16x8xf32>
    %cst_36 = arith.constant dense<0.000000e+00> : vector<2x16xf32>
    %99 = vector.multi_reduction <add>, %98, %cst_36 [2] : vector<2x16x8xf32> to vector<2x16xf32>
    %100 = vector.shape_cast %99 : vector<2x16xf32> to vector<2x16x1xf32>
    %101 = tpu.reciprocal %100 {approx = true} : vector<2x16x1xf32> -> vector<2x16x1xf32>
    %102 = vector.broadcast %101 : vector<2x16x1xf32> to vector<2x16x8xf32>
    %103 = arith.mulf %98, %102 : vector<2x16x8xf32>
    "tpu.trace_start"() <{level = 10 : i32, message = "bqk,bkd->bqd"}> : () -> ()
    %cst_37 = arith.constant dense<0.000000e+00> : vector<2x16x8xf32>
    %104 = tpu.matmul %103, %90, %cst_37 {dimension_numbers = #tpu.dot_dimension_numbers<[2], [1], [1], [2], [0, 0, 0, 1, 1, 2], [0], [0]>} : vector<2x16x8xf32>, vector<2x8x8xf32>, vector<2x16x8xf32> -> vector<2x16x8xf32>
    "tpu.trace_stop"() : () -> ()
    %105 = vector.shape_cast %104 : vector<2x16x8xf32> to vector<32x8xf32>
    %106 = vector.extract_strided_slice %23 {offsets = [24, 0], sizes = [8, 32], strides = [1, 1]} : vector<32x32xf32> to vector<8x32xf32>
    %cst_38 = arith.constant dense<0.000000e+00> : vector<32x32xf32>
    %107 = tpu.matmul %105, %106, %cst_38 {dimension_numbers = #tpu.dot_dimension_numbers<[1], [0], [0], [1], [0, 0, 1, 1], [], []>} : vector<32x8xf32>, vector<8x32xf32>, vector<32x32xf32> -> vector<32x32xf32>
    %108 = arith.addf %87, %107 : vector<32x32xf32>
    %c0_39 = arith.constant 0 : index
    %c0_40 = arith.constant 0 : index
    %109 = vector.load %arg9[%c0_39, %c0_40] : memref<1x32xf32, #tpu.memory_space<vmem>>, vector<1x32xf32>
    %110 = vector.broadcast %109 : vector<1x32xf32> to vector<32x32xf32>
    %111 = arith.addf %108, %110 : vector<32x32xf32>
    %112 = arith.addf %111, %0 : vector<32x32xf32>
    %cst_41 = arith.constant dense<0.000000e+00> : vector<32xf32>
    %113 = vector.multi_reduction <add>, %112, %cst_41 [1] : vector<32x32xf32> to vector<32xf32>
    %114 = vector.shape_cast %113 : vector<32xf32> to vector<32x1xf32>
    %cst_42 = arith.constant 3.200000e+01 : f32
    %115 = vector.broadcast %cst_42 : f32 to vector<32x1xf32>
    %116 = arith.divf %114, %115 : vector<32x1xf32>
    %117 = vector.broadcast %116 : vector<32x1xf32> to vector<32x32xf32>
    %118 = arith.subf %112, %117 : vector<32x32xf32>
    %119 = arith.mulf %118, %118 : vector<32x32xf32>
    %cst_43 = arith.constant dense<0.000000e+00> : vector<32xf32>
    %120 = vector.multi_reduction <add>, %119, %cst_43 [1] : vector<32x32xf32> to vector<32xf32>
    %121 = vector.shape_cast %120 : vector<32xf32> to vector<32x1xf32>
    %cst_44 = arith.constant 3.200000e+01 : f32
    %122 = vector.broadcast %cst_44 : f32 to vector<32x1xf32>
    %123 = arith.divf %121, %122 : vector<32x1xf32>
    %124 = vector.broadcast %116 : vector<32x1xf32> to vector<32x32xf32>
    %125 = arith.subf %112, %124 : vector<32x32xf32>
    %cst_45 = arith.constant 9.99999974E-6 : f32
    %126 = vector.broadcast %cst_45 : f32 to vector<32x1xf32>
    %127 = arith.addf %123, %126 : vector<32x1xf32>
    %128 = math.rsqrt %127 : vector<32x1xf32>
    %129 = vector.broadcast %128 : vector<32x1xf32> to vector<32x32xf32>
    %130 = arith.mulf %125, %129 : vector<32x32xf32>
    %c0_46 = arith.constant 0 : index
    %c0_47 = arith.constant 0 : index
    %131 = vector.load %arg10[%c0_46, %c0_47] : memref<1x32xf32, #tpu.memory_space<vmem>>, vector<1x32xf32>
    %132 = vector.broadcast %131 : vector<1x32xf32> to vector<32x32xf32>
    %133 = arith.mulf %130, %132 : vector<32x32xf32>
    %c0_48 = arith.constant 0 : index
    %c0_49 = arith.constant 0 : index
    %134 = vector.load %arg11[%c0_48, %c0_49] : memref<1x32xf32, #tpu.memory_space<vmem>>, vector<1x32xf32>
    %135 = vector.broadcast %134 : vector<1x32xf32> to vector<32x32xf32>
    %136 = arith.addf %133, %135 : vector<32x32xf32>
    %c0_50 = arith.constant 0 : index
    %c0_51 = arith.constant 0 : index
    %137 = vector.load %arg12[%c0_50, %c0_51] : memref<32x32xf32, #tpu.memory_space<vmem>>, vector<32x32xf32>
    tpu.vector_store %arg12[%c0_50, %c0_51], %136 {strides = array<i32>} : memref<32x32xf32, #tpu.memory_space<vmem>>, vector<32x32xf32>,
    return
  }
  func.func @transform_0(%arg0: i32) -> (i32, i32) {
    %c0_i32 = arith.constant 0 : i32
    %c0_i32_0 = arith.constant 0 : i32
    return %arg0, %c0_i32 : i32, i32
  }
  func.func @transform_1(%arg0: i32) -> (i32, i32) {
    %c0_i32 = arith.constant 0 : i32
    %c0_i32_0 = arith.constant 0 : i32
    return %arg0, %c0_i32 : i32, i32
  }
  func.func @transform_2(%arg0: i32) -> (i32, i32) {
    %c0_i32 = arith.constant 0 : i32
    %c0_i32_0 = arith.constant 0 : i32
    return %arg0, %c0_i32 : i32, i32
  }
  func.func @transform_3(%arg0: i32) -> (i32, i32) {
    %c0_i32 = arith.constant 0 : i32
    %c0_i32_0 = arith.constant 0 : i32
    %c0_i32_1 = arith.constant 0 : i32
    return %c0_i32, %c0_i32_0 : i32, i32
  }
  func.func @transform_4(%arg0: i32) -> (i32, i32) {
    %c0_i32 = arith.constant 0 : i32
    %c0_i32_0 = arith.constant 0 : i32
    %c0_i32_1 = arith.constant 0 : i32
    return %c0_i32, %c0_i32_0 : i32, i32
  }
  func.func @transform_5(%arg0: i32) -> (i32, i32) {
    %c0_i32 = arith.constant 0 : i32
    %c0_i32_0 = arith.constant 0 : i32
    %c0_i32_1 = arith.constant 0 : i32
    return %c0_i32, %c0_i32_0 : i32, i32
  }
  func.func @transform_6(%arg0: i32) -> (i32, i32) {
    %c0_i32 = arith.constant 0 : i32
    %c0_i32_0 = arith.constant 0 : i32
    %c0_i32_1 = arith.constant 0 : i32
    return %c0_i32, %c0_i32_0 : i32, i32
  }
  func.func @transform_7(%arg0: i32) -> (i32, i32) {
    %c0_i32 = arith.constant 0 : i32
    %c0_i32_0 = arith.constant 0 : i32
    %c0_i32_1 = arith.constant 0 : i32
    return %c0_i32, %c0_i32_0 : i32, i32
  }
  func.func @transform_8(%arg0: i32) -> (i32, i32) {
    %c0_i32 = arith.constant 0 : i32
    %c0_i32_0 = arith.constant 0 : i32
    %c0_i32_1 = arith.constant 0 : i32
    return %c0_i32, %c0_i32_0 : i32, i32
  }
  func.func @transform_9(%arg0: i32) -> (i32, i32) {
    %c0_i32 = arith.constant 0 : i32
    %c0_i32_0 = arith.constant 0 : i32
    %c0_i32_1 = arith.constant 0 : i32
    return %c0_i32, %c0_i32_0 : i32, i32
  }
  func.func @transform_10(%arg0: i32) -> (i32, i32) {
    %c0_i32 = arith.constant 0 : i32
    %c0_i32_0 = arith.constant 0 : i32
    %c0_i32_1 = arith.constant 0 : i32
    return %c0_i32, %c0_i32_0 : i32, i32
  }
  func.func @transform_11(%arg0: i32) -> (i32, i32) {
    %c0_i32 = arith.constant 0 : i32
    %c0_i32_0 = arith.constant 0 : i32
    return %arg0, %c0_i32 : i32, i32
  }
}

</mosaic_0001>

<llo_original>
// kernel: tpu_custom_call.1
$region0: #{tpu_custom_call.1}
  #allocation0 [shape = 'u32[]', space=smem, size = 0x4, offset = 0x4, fixed_abs, tag = 'smem constant byte address 0x4 - core index']
  #allocation1 [shape = 'u32[144,128]{1,0:T(1,128)}', space=vmem, size = 0x12000, scoped, tag = 'internal scratch']
  %s0 = inlined_call_operand.hbm [shape: f32[32,32], index: 0, kind: input, shape index: {}]
  %s1 = inlined_call_operand.hbm [shape: f32[16,32], index: 1, kind: input, shape index: {}]
  %s2 = inlined_call_operand.vmem [shape: f32[2,8], index: 2, kind: input, shape index: {}]
  %s3 = inlined_call_operand.hbm [shape: f32[32,32], index: 3, kind: input, shape index: {}]
  %s4 = inlined_call_operand.vmem [shape: f32[1,32], index: 4, kind: input, shape index: {}]
  %s5 = inlined_call_operand.hbm [shape: f32[32,64], index: 5, kind: input, shape index: {}]
  %s6 = inlined_call_operand.vmem [shape: f32[1,64], index: 6, kind: input, shape index: {}]
  %s7 = inlined_call_operand.hbm [shape: f32[32,32], index: 7, kind: input, shape index: {}]
  %s8 = inlined_call_operand.vmem [shape: f32[1,32], index: 8, kind: input, shape index: {}]
  %s9 = inlined_call_operand.vmem [shape: f32[1,32], index: 9, kind: input, shape index: {}]
  %s10 = inlined_call_operand.vmem [shape: f32[1,32], index: 10, kind: input, shape index: {}]
  %s11 = inlined_call_operand.hbm [shape: f32[32,32], index: 11, kind: output, shape index: {}]
  %s12 = sld [smem:[#allocation0]]
  $region74: #{tpu_custom_call.1} parent=0
    _
  %s14 = ssub.s32 1, %s12
  %s15 = scalar_select 0, %s14, %s12
  $region1: #{tpu_custom_call.1} parent=0
    #allocation2 [shape = 'u8[16384]{0}', space=vmem, size = 0x4000, scoped, tag = 'input window, operand 0, single buffered']
    #allocation3 [shape = 's32[1]{0}', space=sflag, size = 0x4, scoped, tag = 'scoped memory for tpu_custom_call.1']
    #allocation4 [shape = 's32[1]{0}', space=sflag, size = 0x4, scoped, tag = 'scoped memory for tpu_custom_call.1']
    #allocation5 [shape = 'u8[8192]{0}', space=vmem, size = 0x2000, scoped, tag = 'input window, operand 1, single buffered']
    #allocation6 [shape = 's32[1]{0}', space=sflag, size = 0x4, scoped, tag = 'scoped memory for tpu_custom_call.1']
    #allocation7 [shape = 'u8[16384]{0}', space=vmem, size = 0x4000, scoped, tag = 'input window, operand 3, single buffered']
    #allocation8 [shape = 'u8[16384]{0}', space=vmem, size = 0x4000, scoped, tag = 'input window, operand 5, single buffered']
    #allocation9 [shape = 's32[1]{0}', space=sflag, size = 0x4, scoped, tag = 'scoped memory for tpu_custom_call.1']
    #allocation10 [shape = 'u8[16384]{0}', space=vmem, size = 0x4000, scoped, tag = 'input window, operand 7, single buffered']
    #allocation11 [shape = 'u8[16384]{0}', space=vmem, size = 0x4000, scoped, tag = 'output window, operand 0, single buffered']
    %16 = vsyncpa [#allocation3], 0
    %17 = vsyncpa [#allocation6], 0
    %18 = vsyncpa [#allocation9], 0
    %19 = vsyncpa [#allocation4], 0
    // Predicated region
    $region2: #{tpu_custom_call.1} parent=1 // pred_check
      _
    $region3: #{tpu_custom_call.1} parent=1 // pred_check_branch
      %21 = sbr.rel (0) target = $region5
    $region4: #{tpu_custom_call.1} parent=1 // pred_region
      %s23 = ssub.s32 512, 512
      %24 = vsyncadd [#allocation3], %s23
      %s25 = sshll.u32 [#allocation2], 4
      %s26 = int_to_ptr.vmem [resolvable:$true] %s25
      %31 = dma.hbm_to_vmem [thread:$0]  %s0, 512, %s26, [#allocation3], 128, 128, 8
    $region5: #{tpu_custom_call.1} parent=1 // pred_fallthru
      _
    // Predicated region
    $region6: #{tpu_custom_call.1} parent=1 // pred_check
      _
    $region7: #{tpu_custom_call.1} parent=1 // pred_check_branch
      %33 = sbr.rel (0) target = $region9
    $region8: #{tpu_custom_call.1} parent=1 // pred_region
      %s35 = ssub.s32 256, 256
      %36 = vsyncadd [#allocation6], %s35
      %s37 = sshll.u32 [#allocation5], 4
      %s38 = int_to_ptr.vmem [resolvable:$true] %s37
      %43 = dma.hbm_to_vmem [thread:$0]  %s1, 256, %s38, [#allocation6], 128, 128, 8
    $region9: #{tpu_custom_call.1} parent=1 // pred_fallthru
      _
    // Predicated region
    $region10: #{tpu_custom_call.1} parent=1 // pred_check
      _
    $region11: #{tpu_custom_call.1} parent=1 // pred_check_branch
      %45 = sbr.rel (0) target = $region13
    $region12: #{tpu_custom_call.1} parent=1 // pred_region
      _
    $region13: #{tpu_custom_call.1} parent=1 // pred_fallthru
      _
    // Predicated region
    $region14: #{tpu_custom_call.1} parent=1 // pred_check
      _
    $region15: #{tpu_custom_call.1} parent=1 // pred_check_branch
      %47 = sbr.rel (0) target = $region17
    $region16: #{tpu_custom_call.1} parent=1 // pred_region
      %s49 = ssub.s32 512, 512
      %50 = vsyncadd [#allocation6], %s49
      %s51 = sshll.u32 [#allocation7], 4
      %s52 = int_to_ptr.vmem [resolvable:$true] %s51
      %57 = dma.hbm_to_vmem [thread:$0]  %s3, 512, %s52, [#allocation6], 128, 128, 8
    $region17: #{tpu_custom_call.1} parent=1 // pred_fallthru
      _
    // Predicated region
    $region18: #{tpu_custom_call.1} parent=1 // pred_check
      _
    $region19: #{tpu_custom_call.1} parent=1 // pred_check_branch
      %59 = sbr.rel (0) target = $region21
    $region20: #{tpu_custom_call.1} parent=1 // pred_region
      _
    $region21: #{tpu_custom_call.1} parent=1 // pred_fallthru
      _
    // Predicated region
    $region22: #{tpu_custom_call.1} parent=1 // pred_check
      _
    $region23: #{tpu_custom_call.1} parent=1 // pred_check_branch
      %61 = sbr.rel (0) target = $region25
    $region24: #{tpu_custom_call.1} parent=1 // pred_region
      %s63 = ssub.s32 512, 512
      %64 = vsyncadd [#allocation9], %s63
      %s65 = sshll.u32 [#allocation8], 4
      %s66 = int_to_ptr.vmem [resolvable:$true] %s65
      %71 = dma.hbm_to_vmem [thread:$0]  %s5, 512, %s66, [#allocation9], 128, 128, 8
    $region25: #{tpu_custom_call.1} parent=1 // pred_fallthru
      _
    // Predicated region
    $region26: #{tpu_custom_call.1} parent=1 // pred_check
      _
    $region27: #{tpu_custom_call.1} parent=1 // pred_check_branch
      %73 = sbr.rel (0) target = $region29
    $region28: #{tpu_custom_call.1} parent=1 // pred_region
      _
    $region29: #{tpu_custom_call.1} parent=1 // pred_fallthru
      _
    // Predicated region
    $region30: #{tpu_custom_call.1} parent=1 // pred_check
      _
    $region31: #{tpu_custom_call.1} parent=1 // pred_check_branch
      %75 = sbr.rel (0) target = $region33
    $region32: #{tpu_custom_call.1} parent=1 // pred_region
      %s77 = ssub.s32 512, 512
      %78 = vsyncadd [#allocation9], %s77
      %s79 = sshll.u32 [#allocation10], 4
      %s80 = int_to_ptr.vmem [resolvable:$true] %s79
      %85 = dma.hbm_to_vmem [thread:$0]  %s7, 512, %s80, [#allocation9], 128, 128, 8
    $region33: #{tpu_custom_call.1} parent=1 // pred_fallthru
      _
    // Predicated region
    $region34: #{tpu_custom_call.1} parent=1 // pred_check
      _
    $region35: #{tpu_custom_call.1} parent=1 // pred_check_branch
      %87 = sbr.rel (0) target = $region37
    $region36: #{tpu_custom_call.1} parent=1 // pred_region
      _
    $region37: #{tpu_custom_call.1} parent=1 // pred_fallthru
      _
    // Predicated region
    $region38: #{tpu_custom_call.1} parent=1 // pred_check
      _
    $region39: #{tpu_custom_call.1} parent=1 // pred_check_branch
      %89 = sbr.rel (0) target = $region41
    $region40: #{tpu_custom_call.1} parent=1 // pred_region
      _
    $region41: #{tpu_custom_call.1} parent=1 // pred_fallthru
      _
    // Predicated region
    $region42: #{tpu_custom_call.1} parent=1 // pred_check
      _
    $region43: #{tpu_custom_call.1} parent=1 // pred_check_branch
      %91 = sbr.rel (0) target = $region45
    $region44: #{tpu_custom_call.1} parent=1 // pred_region
      _
    $region45: #{tpu_custom_call.1} parent=1 // pred_fallthru
      _
    // Predicated region
    $region46: #{tpu_custom_call.1} parent=1 // pred_check
      _
    $region47: #{tpu_custom_call.1} parent=1 // pred_check_branch
      %93 = sbr.rel (0) target = $region49
    $region48: #{tpu_custom_call.1} parent=1 // pred_region
      %94 = dma.done [#allocation3], 512
    $region49: #{tpu_custom_call.1} parent=1 // pred_fallthru
      _
    // Predicated region
    $region50: #{tpu_custom_call.1} parent=1 // pred_check
      _
    $region51: #{tpu_custom_call.1} parent=1 // pred_check_branch
      %96 = sbr.rel (0) target = $region53
    $region52: #{tpu_custom_call.1} parent=1 // pred_region
      %97 = dma.done [#allocation6], 256
    $region53: #{tpu_custom_call.1} parent=1 // pred_fallthru
      _
    // Predicated region
    $region54: #{tpu_custom_call.1} parent=1 // pred_check
      _
    $region55: #{tpu_custom_call.1} parent=1 // pred_check_branch
      %99 = sbr.rel (0) target = $region57
    $region56: #{tpu_custom_call.1} parent=1 // pred_region
      %100 = dma.done [#allocation6], 512
    $region57: #{tpu_custom_call.1} parent=1 // pred_fallthru
      _
    // Predicated region
    $region58: #{tpu_custom_call.1} parent=1 // pred_check
      _
    $region59: #{tpu_custom_call.1} parent=1 // pred_check_branch
      %102 = sbr.rel (0) target = $region61
    $region60: #{tpu_custom_call.1} parent=1 // pred_region
      %103 = dma.done [#allocation9], 512
    $region61: #{tpu_custom_call.1} parent=1 // pred_fallthru
      _
    // Predicated region
    $region62: #{tpu_custom_call.1} parent=1 // pred_check
      _
    $region63: #{tpu_custom_call.1} parent=1 // pred_check_branch
      %105 = sbr.rel (0) target = $region65
    $region64: #{tpu_custom_call.1} parent=1 // pred_region
      %106 = dma.done [#allocation9], 512
    $region65: #{tpu_custom_call.1} parent=1 // pred_fallthru
      _
    %v107 = vld [vmem:[#allocation2] sm:$0xff]
    %v108 = vld [vmem:[#allocation2 + $0x8] sm:$0xff]
    %v109 = vld [vmem:[#allocation2 + $0x10] sm:$0xff]
    %v110 = vld [vmem:[#allocation2 + $0x18] sm:$0xff]
    %v111 = vld [vmem:[#allocation5] sm:$0xff]
    %v112 = vld [vmem:[#allocation5 + $0x8] sm:$0xff]
    %v113 = vld [vmem:[#allocation7] sm:$0xff]
    %v114 = vld [vmem:[#allocation7 + $0x8] sm:$0xff]
    %v115 = vld [vmem:[#allocation7 + $0x10] sm:$0xff]
    %v116 = vld [vmem:[#allocation7 + $0x18] sm:$0xff]
    %v117 = vld [vmem:[%s4] sm:$0x1]
    %v119 = vlaneseq
    %v120 = vshrl.u32 %v119, 7
    %v121 = vsub.s32 0, %v120
    %v122 = vrot.slane %v117, %v121
    %vm124 = vcmask 261120
    %v126 = vsel %vm124, %v107, 0
    %v129 = vsel %vm124, %v108, 0
    %v132 = vsel %vm124, %v109, 0
    %v135 = vsel %vm124, %v110, 0
    %137 = vmatprep.subr.mxu0 0.0
    %138 = vmatpush1.msra.mxu0 %v113
    %139 = vmatprep.subr.mxu0 0.0
    %140 = vmatpush1.msra.mxu0 %v114
    %141 = vmatprep.subr.mxu0 0.0
    %142 = vmatpush1.msra.mxu0 %v115
    %143 = vmatprep.subr.mxu0 0.0
    %144 = vmatpush1.msra.mxu0 %v116
    %145 = vmatprep.subr.mxu0 0.0
    %146 = vmatpush1.msra.mxu0 0.0
    %147 = vmatprep.subr.mxu0 0.0
    %148 = vmatpush1.msra.mxu0 0.0
    %149 = vmatprep.subr.mxu0 0.0
    %150 = vmatpush1.msra.mxu0 0.0
    %151 = vmatprep.subr.mxu0 0.0
    %152 = vmatpush1.msra.mxu0 0.0
    %153 = vmatprep.subr.mxu0 0.0
    %154 = vmatpush1.msra.mxu0 0.0
    %155 = vmatprep.subr.mxu0 0.0
    %156 = vmatpush1.msra.mxu0 0.0
    %157 = vmatprep.subr.mxu0 0.0
    %158 = vmatpush1.msra.mxu0 0.0
    %159 = vmatprep.subr.mxu0 0.0
    %160 = vmatpush1.msra.mxu0 0.0
    %161 = vmatprep.subr.mxu0 0.0
    %162 = vmatpush1.msra.mxu0 0.0
    %163 = vmatprep.subr.mxu0 0.0
    %164 = vmatpush1.msra.mxu0 0.0
    %165 = vmatprep.subr.mxu0 0.0
    %166 = vmatpush1.msra.mxu0 0.0
    %167 = vmatprep.subr.mxu0 0.0
    %168 = vmatpush1.msra.mxu0 0.0
    %169 = vmatprep.subr.mxu0 0.0
    %170 = vmatpush1.msra.mxu0 0.0
    %171 = vmatprep.subr.mxu0 0.0
    %172 = vmatpush1.msra.mxu0 0.0
    %173 = vmatprep.subr.mxu0 0.0
    %174 = vmatpush1.msra.mxu0 0.0
    %175 = vmatprep.subr.mxu0 0.0
    %176 = vmatpush1.msra.mxu0 0.0
    %177 = vmatprep.subr.mxu0 0.0
    %178 = vmatpush1.msra.mxu0 0.0
    %179 = vmatprep.subr.mxu0 0.0
    %180 = vmatpush1.msra.mxu0 0.0
    %181 = vmatprep.subr.mxu0 0.0
    %182 = vmatpush1.msra.mxu0 0.0
    %183 = vmatprep.subr.mxu0 0.0
    %184 = vmatpush1.msra.mxu0 0.0
    %185 = vmatprep.subr.mxu0 0.0
    %186 = vmatpush1.msra.mxu0 0.0
    %187 = vmatprep.subr.mxu0 0.0
    %188 = vmatpush1.msra.mxu0 0.0
    %189 = vmatprep.subr.mxu0 0.0
    %190 = vmatpush1.msra.mxu0 0.0
    %191 = vmatprep.subr.mxu0 0.0
    %192 = vmatpush1.msra.mxu0 0.0
    %193 = vmatprep.subr.mxu0 0.0
    %194 = vmatpush1.msra.mxu0 0.0
    %195 = vmatprep.subr.mxu0 0.0
    %196 = vmatpush1.msra.mxu0 0.0
    %197 = vmatprep.subr.mxu0 0.0
    %198 = vmatpush1.msra.mxu0 0.0
    %199 = vmatprep.subr.mxu0 0.0
    %200 = vmatpush1.msra.mxu0 0.0
    %201 = vmatprep.mubr.f32.mxu0 0.0
    %202 = vmatmul.mubr.f32.gmra.mrb[0].mxu0 %v126
    %v203 = vpop.f32.mrb[0].mxu0
    %v204 = vadd.f32 %v122, %v203
    %v205 = vpop.f32.mrb[0].mxu0
    %206 = vmatprep.mubr.f32.mxu0 0.0
    %207 = vmatmul.mubr.f32.gmra.mrb[0].mxu0 %v129
    %v208 = vpop.f32.mrb[0].mxu0
    %v209 = vadd.f32 %v122, %v208
    %v210 = vpop.f32.mrb[0].mxu0
    %211 = vmatprep.mubr.f32.mxu0 0.0
    %212 = vmatmul.mubr.f32.gmra.mrb[0].mxu0 %v132
    %v213 = vpop.f32.mrb[0].mxu0
    %v214 = vadd.f32 %v122, %v213
    %v215 = vpop.f32.mrb[0].mxu0
    %216 = vmatprep.mubr.f32.mxu0 0.0
    %217 = vmatmul.mubr.f32.gmra.mrb[0].mxu0 %v135
    %v218 = vpop.f32.mrb[0].mxu0
    %v219 = vadd.f32 %v122, %v218
    %v220 = vpop.f32.mrb[0].mxu0
    %221 = vdwg.mxu0
    %v222 = vld [vmem:[#allocation8] sm:$0xff]
    %v223 = vld [vmem:[#allocation8 + $0x8] sm:$0xff]
    %v224 = vld [vmem:[#allocation8 + $0x10] sm:$0xff]
    %v225 = vld [vmem:[#allocation8 + $0x18] sm:$0xff]
    %v226 = vld [vmem:[%s6] sm:$0x1]
    %v228 = vlaneseq
    %v229 = vshrl.u32 %v228, 7
    %v230 = vsub.s32 0, %v229
    %v231 = vrot.slane %v226, %v230
    %v234 = vsel %vm124, %v111, 0
    %v237 = vsel %vm124, %v112, 0
    %239 = vmatprep.subr.mxu0 0.0
    %240 = vmatpush1.msra.mxu0 %v222
    %241 = vmatprep.subr.mxu0 0.0
    %242 = vmatpush1.msra.mxu0 %v223
    %243 = vmatprep.subr.mxu0 0.0
    %244 = vmatpush1.msra.mxu0 %v224
    %245 = vmatprep.subr.mxu0 0.0
    %246 = vmatpush1.msra.mxu0 %v225
    %247 = vmatprep.subr.mxu0 0.0
    %248 = vmatpush1.msra.mxu0 0.0
    %249 = vmatprep.subr.mxu0 0.0
    %250 = vmatpush1.msra.mxu0 0.0
    %251 = vmatprep.subr.mxu0 0.0
    %252 = vmatpush1.msra.mxu0 0.0
    %253 = vmatprep.subr.mxu0 0.0
    %254 = vmatpush1.msra.mxu0 0.0
    %255 = vmatprep.subr.mxu0 0.0
    %256 = vmatpush1.msra.mxu0 0.0
    %257 = vmatprep.subr.mxu0 0.0
    %258 = vmatpush1.msra.mxu0 0.0
    %259 = vmatprep.subr.mxu0 0.0
    %260 = vmatpush1.msra.mxu0 0.0
    %261 = vmatprep.subr.mxu0 0.0
    %262 = vmatpush1.msra.mxu0 0.0
    %263 = vmatprep.subr.mxu0 0.0
    %264 = vmatpush1.msra.mxu0 0.0
    %265 = vmatprep.subr.mxu0 0.0
    %266 = vmatpush1.msra.mxu0 0.0
    %267 = vmatprep.subr.mxu0 0.0
    %268 = vmatpush1.msra.mxu0 0.0
    %269 = vmatprep.subr.mxu0 0.0
    %270 = vmatpush1.msra.mxu0 0.0
    %271 = vmatprep.subr.mxu0 0.0
    %272 = vmatpush1.msra.mxu0 0.0
    %273 = vmatprep.subr.mxu0 0.0
    %274 = vmatpush1.msra.mxu0 0.0
    %275 = vmatprep.subr.mxu0 0.0
    %276 = vmatpush1.msra.mxu0 0.0
    %277 = vmatprep.subr.mxu0 0.0
    %278 = vmatpush1.msra.mxu0 0.0
    %279 = vmatprep.subr.mxu0 0.0
    %280 = vmatpush1.msra.mxu0 0.0
    %281 = vmatprep.subr.mxu0 0.0
    %282 = vmatpush1.msra.mxu0 0.0
    %283 = vmatprep.subr.mxu0 0.0
    %284 = vmatpush1.msra.mxu0 0.0
    %285 = vmatprep.subr.mxu0 0.0
    %286 = vmatpush1.msra.mxu0 0.0
    %287 = vmatprep.subr.mxu0 0.0
    %288 = vmatpush1.msra.mxu0 0.0
    %289 = vmatprep.subr.mxu0 0.0
    %290 = vmatpush1.msra.mxu0 0.0
    %291 = vmatprep.subr.mxu0 0.0
    %292 = vmatpush1.msra.mxu0 0.0
    %293 = vmatprep.subr.mxu0 0.0
    %294 = vmatpush1.msra.mxu0 0.0
    %295 = vmatprep.subr.mxu0 0.0
    %296 = vmatpush1.msra.mxu0 0.0
    %297 = vmatprep.subr.mxu0 0.0
    %298 = vmatpush1.msra.mxu0 0.0
    %299 = vmatprep.subr.mxu0 0.0
    %300 = vmatpush1.msra.mxu0 0.0
    %301 = vmatprep.subr.mxu0 0.0
    %302 = vmatpush1.msra.mxu0 0.0
    %303 = vmatprep.mubr.f32.mxu0 0.0
    %304 = vmatmul.mubr.f32.gmra.mrb[0].mxu0 %v234
    %v305 = vpop.f32.mrb[0].mxu0
    %v306 = vadd.f32 %v231, %v305
    %v307 = vpop.f32.mrb[0].mxu0
    %308 = vmatprep.mubr.f32.mxu0 0.0
    %309 = vmatmul.mubr.f32.gmra.mrb[0].mxu0 %v237
    %v310 = vpop.f32.mrb[0].mxu0
    %v311 = vadd.f32 %v231, %v310
    %v312 = vpop.f32.mrb[0].mxu0
    %313 = vdwg.mxu0
    %v314 = vld [vmem:[%s2] sm:$0x3]
    %v315 = vsub.f32 1.0, %v314
    %v316 = vmul.f32 %v315, 3.5355338e+09
    %v319 = vunpack.c.l.s4 1966171168
    %v320 = vunpack.c.0.s8 %v319
    %v321 = vlaneseq
    %v322 = vshrl.u32 %v321, 7
    %v323 = vsub.s32 %v320, %v322
    %v324 = vrot.slane %v316, %v323
    %v325 = vcombine.high %v324, %v324
    %v327 = vunpack.c.l.s4 1966171168
    %v328 = vunpack.c.0.s8 %v327
    %v329 = vlaneseq
    %v330 = vshrl.u32 %v329, 7
    %v331 = vsub.s32 %v328, %v330
    %v332 = vrot.slane %v324, %v331
    %v334 = vunpack.c.l.s4 1966171168
    %v335 = vunpack.c.0.s8 %v334
    %v336 = vlaneseq
    %v337 = vshrl.u32 %v336, 7
    %v338 = vsub.s32 %v335, %v337
    %v339 = vrot.slane %v325, %v338
    %v340 = vld [vmem:[#allocation10] sm:$0xff]
    %v341 = vld [vmem:[#allocation10 + $0x8] sm:$0xff]
    %v342 = vld [vmem:[#allocation10 + $0x10] sm:$0xff]
    %v343 = vld [vmem:[#allocation10 + $0x18] sm:$0xff]
    %vm344 = vcmask 64512
    %v346 = vsel %vm344, %v204, 0
    %v349 = vsel %vm344, %v209, 0
    %v352 = vsel %vm344, %v306, 0
    %354 = vmatprep.subr.mxu0 0.0
    %355 = vmatpush1.xpose.msra.mxu0 %v352
    %356 = vmatprep.subr.mxu0 0.0
    %357 = vmatpush1.xpose.msra.mxu0 0.0
    %358 = vmatprep.subr.mxu0 0.0
    %359 = vmatpush1.xpose.msra.mxu0 0.0
    %360 = vmatprep.subr.mxu0 0.0
    %361 = vmatpush1.xpose.msra.mxu0 0.0
    %362 = vmatprep.subr.mxu0 0.0
    %363 = vmatpush1.xpose.msra.mxu0 0.0
    %364 = vmatprep.subr.mxu0 0.0
    %365 = vmatpush1.xpose.msra.mxu0 0.0
    %366 = vmatprep.subr.mxu0 0.0
    %367 = vmatpush1.xpose.msra.mxu0 0.0
    %368 = vmatprep.subr.mxu0 0.0
    %369 = vmatpush1.xpose.msra.mxu0 0.0
    %370 = vmatprep.subr.mxu0 0.0
    %371 = vmatpush1.xpose.msra.mxu0 0.0
    %372 = vmatprep.subr.mxu0 0.0
    %373 = vmatpush1.xpose.msra.mxu0 0.0
    %374 = vmatprep.subr.mxu0 0.0
    %375 = vmatpush1.xpose.msra.mxu0 0.0
    %376 = vmatprep.subr.mxu0 0.0
    %377 = vmatpush1.xpose.msra.mxu0 0.0
    %378 = vmatprep.subr.mxu0 0.0
    %379 = vmatpush1.xpose.msra.mxu0 0.0
    %380 = vmatprep.subr.mxu0 0.0
    %381 = vmatpush1.xpose.msra.mxu0 0.0
    %382 = vmatprep.subr.mxu0 0.0
    %383 = vmatpush1.xpose.msra.mxu0 0.0
    %384 = vmatprep.subr.mxu0 0.0
    %385 = vmatpush1.xpose.msra.mxu0 0.0
    %386 = vmatprep.subr.mxu0 0.0
    %387 = vmatpush1.xpose.msra.mxu0 0.0
    %388 = vmatprep.subr.mxu0 0.0
    %389 = vmatpush1.xpose.msra.mxu0 0.0
    %390 = vmatprep.subr.mxu0 0.0
    %391 = vmatpush1.xpose.msra.mxu0 0.0
    %392 = vmatprep.subr.mxu0 0.0
    %393 = vmatpush1.xpose.msra.mxu0 0.0
    %394 = vmatprep.subr.mxu0 0.0
    %395 = vmatpush1.xpose.msra.mxu0 0.0
    %396 = vmatprep.subr.mxu0 0.0
    %397 = vmatpush1.xpose.msra.mxu0 0.0
    %398 = vmatprep.subr.mxu0 0.0
    %399 = vmatpush1.xpose.msra.mxu0 0.0
    %400 = vmatprep.subr.mxu0 0.0
    %401 = vmatpush1.xpose.msra.mxu0 0.0
    %402 = vmatprep.subr.mxu0 0.0
    %403 = vmatpush1.xpose.msra.mxu0 0.0
    %404 = vmatprep.subr.mxu0 0.0
    %405 = vmatpush1.xpose.msra.mxu0 0.0
    %406 = vmatprep.subr.mxu0 0.0
    %407 = vmatpush1.xpose.msra.mxu0 0.0
    %408 = vmatprep.subr.mxu0 0.0
    %409 = vmatpush1.xpose.msra.mxu0 0.0
    %410 = vmatprep.subr.mxu0 0.0
    %411 = vmatpush1.xpose.msra.mxu0 0.0
    %412 = vmatprep.subr.mxu0 0.0
    %413 = vmatpush1.xpose.msra.mxu0 0.0
    %414 = vmatprep.subr.mxu0 0.0
    %415 = vmatpush1.xpose.msra.mxu0 0.0
    %416 = vmatprep.subr.mxu0 0.0
    %417 = vmatpush1.xpose.msra.mxu0 0.0
    %418 = vmatprep.mubr.f32.mxu0 0.0
    %419 = vmatmul.mubr.f32.gmra.mrb[0].mxu0 %v346
    %v420 = vpop.f32.mrb[0].mxu0
    %v421 = vadd.f32 0.0, %v420
    %v422 = vpop.f32.mrb[0].mxu0
    %423 = vmatprep.mubr.f32.mxu0 0.0
    %424 = vmatmul.mubr.f32.gmra.mrb[0].mxu0 %v349
    %v425 = vpop.f32.mrb[0].mxu0
    %v426 = vadd.f32 0.0, %v425
    %v427 = vpop.f32.mrb[0].mxu0
    %428 = vdwg.mxu0
    %v430 = vsel %vm344, %v214, 0
    %v433 = vsel %vm344, %v219, 0
    %v436 = vsel %vm344, %v311, 0
    %438 = vmatprep.subr.mxu0 0.0
    %439 = vmatpush1.xpose.msra.mxu0 %v436
    %440 = vmatprep.subr.mxu0 0.0
    %441 = vmatpush1.xpose.msra.mxu0 0.0
    %442 = vmatprep.subr.mxu0 0.0
    %443 = vmatpush1.xpose.msra.mxu0 0.0
    %444 = vmatprep.subr.mxu0 0.0
    %445 = vmatpush1.xpose.msra.mxu0 0.0
    %446 = vmatprep.subr.mxu0 0.0
    %447 = vmatpush1.xpose.msra.mxu0 0.0
    %448 = vmatprep.subr.mxu0 0.0
    %449 = vmatpush1.xpose.msra.mxu0 0.0
    %450 = vmatprep.subr.mxu0 0.0
    %451 = vmatpush1.xpose.msra.mxu0 0.0
    %452 = vmatprep.subr.mxu0 0.0
    %453 = vmatpush1.xpose.msra.mxu0 0.0
    %454 = vmatprep.subr.mxu0 0.0
    %455 = vmatpush1.xpose.msra.mxu0 0.0
    %456 = vmatprep.subr.mxu0 0.0
    %457 = vmatpush1.xpose.msra.mxu0 0.0
    %458 = vmatprep.subr.mxu0 0.0
    %459 = vmatpush1.xpose.msra.mxu0 0.0
    %460 = vmatprep.subr.mxu0 0.0
    %461 = vmatpush1.xpose.msra.mxu0 0.0
    %462 = vmatprep.subr.mxu0 0.0
    %463 = vmatpush1.xpose.msra.mxu0 0.0
    %464 = vmatprep.subr.mxu0 0.0
    %465 = vmatpush1.xpose.msra.mxu0 0.0
    %466 = vmatprep.subr.mxu0 0.0
    %467 = vmatpush1.xpose.msra.mxu0 0.0
    %468 = vmatprep.subr.mxu0 0.0
    %469 = vmatpush1.xpose.msra.mxu0 0.0
    %470 = vmatprep.subr.mxu0 0.0
    %471 = vmatpush1.xpose.msra.mxu0 0.0
    %472 = vmatprep.subr.mxu0 0.0
    %473 = vmatpush1.xpose.msra.mxu0 0.0
    %474 = vmatprep.subr.mxu0 0.0
    %475 = vmatpush1.xpose.msra.mxu0 0.0
    %476 = vmatprep.subr.mxu0 0.0
    %477 = vmatpush1.xpose.msra.mxu0 0.0
    %478 = vmatprep.subr.mxu0 0.0
    %479 = vmatpush1.xpose.msra.mxu0 0.0
    %480 = vmatprep.subr.mxu0 0.0
    %481 = vmatpush1.xpose.msra.mxu0 0.0
    %482 = vmatprep.subr.mxu0 0.0
    %483 = vmatpush1.xpose.msra.mxu0 0.0
    %484 = vmatprep.subr.mxu0 0.0
    %485 = vmatpush1.xpose.msra.mxu0 0.0
    %486 = vmatprep.subr.mxu0 0.0
    %487 = vmatpush1.xpose.msra.mxu0 0.0
    %488 = vmatprep.subr.mxu0 0.0
    %489 = vmatpush1.xpose.msra.mxu0 0.0
    %490 = vmatprep.subr.mxu0 0.0
    %491 = vmatpush1.xpose.msra.mxu0 0.0
    %492 = vmatprep.subr.mxu0 0.0
    %493 = vmatpush1.xpose.msra.mxu0 0.0
    %494 = vmatprep.subr.mxu0 0.0
    %495 = vmatpush1.xpose.msra.mxu0 0.0
    %496 = vmatprep.subr.mxu0 0.0
    %497 = vmatpush1.xpose.msra.mxu0 0.0
    %498 = vmatprep.subr.mxu0 0.0
    %499 = vmatpush1.xpose.msra.mxu0 0.0
    %500 = vmatprep.subr.mxu0 0.0
    %501 = vmatpush1.xpose.msra.mxu0 0.0
    %502 = vmatprep.mubr.f32.mxu0 0.0
    %503 = vmatmul.mubr.f32.gmra.mrb[0].mxu0 %v430
    %v504 = vpop.f32.mrb[0].mxu0
    %v505 = vadd.f32 0.0, %v504
    %v506 = vpop.f32.mrb[0].mxu0
    %507 = vmatprep.mubr.f32.mxu0 0.0
    %508 = vmatmul.mubr.f32.gmra.mrb[0].mxu0 %v433
    %v509 = vpop.f32.mrb[0].mxu0
    %v510 = vadd.f32 0.0, %v509
    %v511 = vpop.f32.mrb[0].mxu0
    %512 = vdwg.mxu0
    %v513 = vlaneseq
    %v514 = vshrl.u32 %v513, 7
    %v515 = vsub.s32 0, %v514
    %v516 = vrot.slane %v332, %v515
    %v517 = vlaneseq
    %v518 = vshrl.u32 %v517, 7
    %v519 = vsub.s32 0, %v518
    %v520 = vrot.slane %v339, %v519
    %v523 = vsub.f32 %v421, %v516
    %v524 = vsub.f32 %v426, %v516
    %v525 = vsub.f32 %v505, %v520
    %v526 = vsub.f32 %v510, %v520
    %v527 = vsel %vm344, %v523, -inf
    %528 = vmax.xlane.f32.xlu0 %v527
    %v529 = vpop.xlane.xlu0 %528
    %v530 = vsel %vm344, %v524, -inf
    %531 = vmax.xlane.f32.xlu0 %v530
    %v532 = vpop.xlane.xlu0 %531
    %v533 = vsel %vm344, %v525, -inf
    %534 = vmax.xlane.f32.xlu0 %v533
    %v535 = vpop.xlane.xlu0 %534
    %v536 = vsel %vm344, %v526, -inf
    %537 = vmax.xlane.f32.xlu0 %v536
    %v538 = vpop.xlane.xlu0 %537
    %v539 = vsub.f32 %v523, %v529
    %v540 = vsub.f32 %v524, %v532
    %v541 = vsub.f32 %v525, %v535
    %v542 = vsub.f32 %v526, %v538
    %v543 = vmul.f32 %v539, 1.442695
    %v544 = vpow.pop %v543
    %v545 = vmul.f32 %v540, 1.442695
    %v546 = vpow.pop %v545
    %v547 = vmul.f32 %v541, 1.442695
    %v548 = vpow.pop %v547
    %v549 = vmul.f32 %v542, 1.442695
    %v550 = vpow.pop %v549
    %v551 = vsel %vm344, %v544, 0.0
    %552 = vadd.xlane.f32.xlu0 %v551
    %v553 = vpop.xlane.xlu0 %552
    %v554 = vsel %vm344, %v546, 0.0
    %555 = vadd.xlane.f32.xlu0 %v554
    %v556 = vpop.xlane.xlu0 %555
    %v557 = vsel %vm344, %v548, 0.0
    %558 = vadd.xlane.f32.xlu0 %v557
    %v559 = vpop.xlane.xlu0 %558
    %v560 = vsel %vm344, %v550, 0.0
    %561 = vadd.xlane.f32.xlu0 %v560
    %v562 = vpop.xlane.xlu0 %561
    %v563 = vrcp.pop %v553
    %v564 = vrcp.pop %v556
    %v565 = vrcp.pop %v559
    %v566 = vrcp.pop %v562
    %v567 = vmul.f32 %v544, %v563
    %v568 = vmul.f32 %v546, %v564
    %v569 = vmul.f32 %v548, %v565
    %v570 = vmul.f32 %v550, %v566
    %571 = vrot.lane.b32.xlu0 %v306, 96
    %v572 = vpop.permute.xlu0 %571
    %v575 = vsel %vm344, %v567, 0
    %v578 = vsel %vm344, %v568, 0
    %580 = vmatprep.subr.mxu0 0.0
    %581 = vmatpush1.msra.mxu0 %v572
    %582 = vmatprep.subr.mxu0 0.0
    %583 = vmatpush1.msra.mxu0 0.0
    %584 = vmatprep.subr.mxu0 0.0
    %585 = vmatpush1.msra.mxu0 0.0
    %586 = vmatprep.subr.mxu0 0.0
    %587 = vmatpush1.msra.mxu0 0.0
    %588 = vmatprep.subr.mxu0 0.0
    %589 = vmatpush1.msra.mxu0 0.0
    %590 = vmatprep.subr.mxu0 0.0
    %591 = vmatpush1.msra.mxu0 0.0
    %592 = vmatprep.subr.mxu0 0.0
    %593 = vmatpush1.msra.mxu0 0.0
    %594 = vmatprep.subr.mxu0 0.0
    %595 = vmatpush1.msra.mxu0 0.0
    %596 = vmatprep.subr.mxu0 0.0
    %597 = vmatpush1.msra.mxu0 0.0
    %598 = vmatprep.subr.mxu0 0.0
    %599 = vmatpush1.msra.mxu0 0.0
    %600 = vmatprep.subr.mxu0 0.0
    %601 = vmatpush1.msra.mxu0 0.0
    %602 = vmatprep.subr.mxu0 0.0
    %603 = vmatpush1.msra.mxu0 0.0
    %604 = vmatprep.subr.mxu0 0.0
    %605 = vmatpush1.msra.mxu0 0.0
    %606 = vmatprep.subr.mxu0 0.0
    %607 = vmatpush1.msra.mxu0 0.0
    %608 = vmatprep.subr.mxu0 0.0
    %609 = vmatpush1.msra.mxu0 0.0
    %610 = vmatprep.subr.mxu0 0.0
    %611 = vmatpush1.msra.mxu0 0.0
    %612 = vmatprep.subr.mxu0 0.0
    %613 = vmatpush1.msra.mxu0 0.0
    %614 = vmatprep.subr.mxu0 0.0
    %615 = vmatpush1.msra.mxu0 0.0
    %616 = vmatprep.subr.mxu0 0.0
    %617 = vmatpush1.msra.mxu0 0.0
    %618 = vmatprep.subr.mxu0 0.0
    %619 = vmatpush1.msra.mxu0 0.0
    %620 = vmatprep.subr.mxu0 0.0
    %621 = vmatpush1.msra.mxu0 0.0
    %622 = vmatprep.subr.mxu0 0.0
    %623 = vmatpush1.msra.mxu0 0.0
    %624 = vmatprep.subr.mxu0 0.0
    %625 = vmatpush1.msra.mxu0 0.0
    %626 = vmatprep.subr.mxu0 0.0
    %627 = vmatpush1.msra.mxu0 0.0
    %628 = vmatprep.subr.mxu0 0.0
    %629 = vmatpush1.msra.mxu0 0.0
    %630 = vmatprep.subr.mxu0 0.0
    %631 = vmatpush1.msra.mxu0 0.0
    %632 = vmatprep.subr.mxu0 0.0
    %633 = vmatpush1.msra.mxu0 0.0
    %634 = vmatprep.subr.mxu0 0.0
    %635 = vmatpush1.msra.mxu0 0.0
    %636 = vmatprep.subr.mxu0 0.0
    %637 = vmatpush1.msra.mxu0 0.0
    %638 = vmatprep.subr.mxu0 0.0
    %639 = vmatpush1.msra.mxu0 0.0
    %640 = vmatprep.subr.mxu0 0.0
    %641 = vmatpush1.msra.mxu0 0.0
    %642 = vmatprep.subr.mxu0 0.0
    %643 = vmatpush1.msra.mxu0 0.0
    %644 = vmatprep.mubr.f32.mxu0 0.0
    %645 = vmatmul.mubr.f32.gmra.mrb[0].mxu0 %v575
    %v646 = vpop.f32.mrb[0].mxu0
    %v647 = vadd.f32 0.0, %v646
    %v648 = vpop.f32.mrb[0].mxu0
    %649 = vmatprep.mubr.f32.mxu0 0.0
    %650 = vmatmul.mubr.f32.gmra.mrb[0].mxu0 %v578
    %v651 = vpop.f32.mrb[0].mxu0
    %v652 = vadd.f32 0.0, %v651
    %v653 = vpop.f32.mrb[0].mxu0
    %654 = vdwg.mxu0
    %655 = vrot.lane.b32.xlu0 %v311, 96
    %v656 = vpop.permute.xlu0 %655
    %v659 = vsel %vm344, %v569, 0
    %v662 = vsel %vm344, %v570, 0
    %664 = vmatprep.subr.mxu0 0.0
    %665 = vmatpush1.msra.mxu0 %v656
    %666 = vmatprep.subr.mxu0 0.0
    %667 = vmatpush1.msra.mxu0 0.0
    %668 = vmatprep.subr.mxu0 0.0
    %669 = vmatpush1.msra.mxu0 0.0
    %670 = vmatprep.subr.mxu0 0.0
    %671 = vmatpush1.msra.mxu0 0.0
    %672 = vmatprep.subr.mxu0 0.0
    %673 = vmatpush1.msra.mxu0 0.0
    %674 = vmatprep.subr.mxu0 0.0
    %675 = vmatpush1.msra.mxu0 0.0
    %676 = vmatprep.subr.mxu0 0.0
    %677 = vmatpush1.msra.mxu0 0.0
    %678 = vmatprep.subr.mxu0 0.0
    %679 = vmatpush1.msra.mxu0 0.0
    %680 = vmatprep.subr.mxu0 0.0
    %681 = vmatpush1.msra.mxu0 0.0
    %682 = vmatprep.subr.mxu0 0.0
    %683 = vmatpush1.msra.mxu0 0.0
    %684 = vmatprep.subr.mxu0 0.0
    %685 = vmatpush1.msra.mxu0 0.0
    %686 = vmatprep.subr.mxu0 0.0
    %687 = vmatpush1.msra.mxu0 0.0
    %688 = vmatprep.subr.mxu0 0.0
    %689 = vmatpush1.msra.mxu0 0.0
    %690 = vmatprep.subr.mxu0 0.0
    %691 = vmatpush1.msra.mxu0 0.0
    %692 = vmatprep.subr.mxu0 0.0
    %693 = vmatpush1.msra.mxu0 0.0
    %694 = vmatprep.subr.mxu0 0.0
    %695 = vmatpush1.msra.mxu0 0.0
    %696 = vmatprep.subr.mxu0 0.0
    %697 = vmatpush1.msra.mxu0 0.0
    %698 = vmatprep.subr.mxu0 0.0
    %699 = vmatpush1.msra.mxu0 0.0
    %700 = vmatprep.subr.mxu0 0.0
    %701 = vmatpush1.msra.mxu0 0.0
    %702 = vmatprep.subr.mxu0 0.0
    %703 = vmatpush1.msra.mxu0 0.0
    %704 = vmatprep.subr.mxu0 0.0
    %705 = vmatpush1.msra.mxu0 0.0
    %706 = vmatprep.subr.mxu0 0.0
    %707 = vmatpush1.msra.mxu0 0.0
    %708 = vmatprep.subr.mxu0 0.0
    %709 = vmatpush1.msra.mxu0 0.0
    %710 = vmatprep.subr.mxu0 0.0
    %711 = vmatpush1.msra.mxu0 0.0
    %712 = vmatprep.subr.mxu0 0.0
    %713 = vmatpush1.msra.mxu0 0.0
    %714 = vmatprep.subr.mxu0 0.0
    %715 = vmatpush1.msra.mxu0 0.0
    %716 = vmatprep.subr.mxu0 0.0
    %717 = vmatpush1.msra.mxu0 0.0
    %718 = vmatprep.subr.mxu0 0.0
    %719 = vmatpush1.msra.mxu0 0.0
    %720 = vmatprep.subr.mxu0 0.0
    %721 = vmatpush1.msra.mxu0 0.0
    %722 = vmatprep.subr.mxu0 0.0
    %723 = vmatpush1.msra.mxu0 0.0
    %724 = vmatprep.subr.mxu0 0.0
    %725 = vmatpush1.msra.mxu0 0.0
    %726 = vmatprep.subr.mxu0 0.0
    %727 = vmatpush1.msra.mxu0 0.0
    %728 = vmatprep.mubr.f32.mxu0 0.0
    %729 = vmatmul.mubr.f32.gmra.mrb[0].mxu0 %v659
    %v730 = vpop.f32.mrb[0].mxu0
    %v731 = vadd.f32 0.0, %v730
    %v732 = vpop.f32.mrb[0].mxu0
    %733 = vmatprep.mubr.f32.mxu0 0.0
    %734 = vmatmul.mubr.f32.gmra.mrb[0].mxu0 %v662
    %v735 = vpop.f32.mrb[0].mxu0
    %v736 = vadd.f32 0.0, %v735
    %v737 = vpop.f32.mrb[0].mxu0
    %738 = vdwg.mxu0
    %739 = vrot.lane.b32.xlu0 %v204, 120
    %v740 = vpop.permute.xlu0 %739
    %741 = vrot.lane.b32.xlu0 %v209, 120
    %v742 = vpop.permute.xlu0 %741
    %743 = vrot.lane.b32.xlu0 %v306, 120
    %v744 = vpop.permute.xlu0 %743
    %v745 = vsel %vm344, %v740, 0
    %v747 = vsel %vm344, %v742, 0
    %v749 = vsel %vm344, %v744, 0
    %751 = vmatprep.subr.mxu0 0.0
    %752 = vmatpush1.xpose.msra.mxu0 %v749
    %753 = vmatprep.subr.mxu0 0.0
    %754 = vmatpush1.xpose.msra.mxu0 0.0
    %755 = vmatprep.subr.mxu0 0.0
    %756 = vmatpush1.xpose.msra.mxu0 0.0
    %757 = vmatprep.subr.mxu0 0.0
    %758 = vmatpush1.xpose.msra.mxu0 0.0
    %759 = vmatprep.subr.mxu0 0.0
    %760 = vmatpush1.xpose.msra.mxu0 0.0
    %761 = vmatprep.subr.mxu0 0.0
    %762 = vmatpush1.xpose.msra.mxu0 0.0
    %763 = vmatprep.subr.mxu0 0.0
    %764 = vmatpush1.xpose.msra.mxu0 0.0
    %765 = vmatprep.subr.mxu0 0.0
    %766 = vmatpush1.xpose.msra.mxu0 0.0
    %767 = vmatprep.subr.mxu0 0.0
    %768 = vmatpush1.xpose.msra.mxu0 0.0
    %769 = vmatprep.subr.mxu0 0.0
    %770 = vmatpush1.xpose.msra.mxu0 0.0
    %771 = vmatprep.subr.mxu0 0.0
    %772 = vmatpush1.xpose.msra.mxu0 0.0
    %773 = vmatprep.subr.mxu0 0.0
    %774 = vmatpush1.xpose.msra.mxu0 0.0
    %775 = vmatprep.subr.mxu0 0.0
    %776 = vmatpush1.xpose.msra.mxu0 0.0
    %777 = vmatprep.subr.mxu0 0.0
    %778 = vmatpush1.xpose.msra.mxu0 0.0
    %779 = vmatprep.subr.mxu0 0.0
    %780 = vmatpush1.xpose.msra.mxu0 0.0
    %781 = vmatprep.subr.mxu0 0.0
    %782 = vmatpush1.xpose.msra.mxu0 0.0
    %783 = vmatprep.subr.mxu0 0.0
    %784 = vmatpush1.xpose.msra.mxu0 0.0
    %785 = vmatprep.subr.mxu0 0.0
    %786 = vmatpush1.xpose.msra.mxu0 0.0
    %787 = vmatprep.subr.mxu0 0.0
    %788 = vmatpush1.xpose.msra.mxu0 0.0
    %789 = vmatprep.subr.mxu0 0.0
    %790 = vmatpush1.xpose.msra.mxu0 0.0
    %791 = vmatprep.subr.mxu0 0.0
    %792 = vmatpush1.xpose.msra.mxu0 0.0
    %793 = vmatprep.subr.mxu0 0.0
    %794 = vmatpush1.xpose.msra.mxu0 0.0
    %795 = vmatprep.subr.mxu0 0.0
    %796 = vmatpush1.xpose.msra.mxu0 0.0
    %797 = vmatprep.subr.mxu0 0.0
    %798 = vmatpush1.xpose.msra.mxu0 0.0
    %799 = vmatprep.subr.mxu0 0.0
    %800 = vmatpush1.xpose.msra.mxu0 0.0
    %801 = vmatprep.subr.mxu0 0.0
    %802 = vmatpush1.xpose.msra.mxu0 0.0
    %803 = vmatprep.subr.mxu0 0.0
    %804 = vmatpush1.xpose.msra.mxu0 0.0
    %805 = vmatprep.subr.mxu0 0.0
    %806 = vmatpush1.xpose.msra.mxu0 0.0
    %807 = vmatprep.subr.mxu0 0.0
    %808 = vmatpush1.xpose.msra.mxu0 0.0
    %809 = vmatprep.subr.mxu0 0.0
    %810 = vmatpush1.xpose.msra.mxu0 0.0
    %811 = vmatprep.subr.mxu0 0.0
    %812 = vmatpush1.xpose.msra.mxu0 0.0
    %813 = vmatprep.subr.mxu0 0.0
    %814 = vmatpush1.xpose.msra.mxu0 0.0
    %815 = vmatprep.mubr.f32.mxu0 0.0
    %816 = vmatmul.mubr.f32.gmra.mrb[0].mxu0 %v745
    %v817 = vpop.f32.mrb[0].mxu0
    %v818 = vadd.f32 0.0, %v817
    %v819 = vpop.f32.mrb[0].mxu0
    %820 = vmatprep.mubr.f32.mxu0 0.0
    %821 = vmatmul.mubr.f32.gmra.mrb[0].mxu0 %v747
    %v822 = vpop.f32.mrb[0].mxu0
    %v823 = vadd.f32 0.0, %v822
    %v824 = vpop.f32.mrb[0].mxu0
    %825 = vdwg.mxu0
    %826 = vrot.lane.b32.xlu0 %v214, 120
    %v827 = vpop.permute.xlu0 %826
    %828 = vrot.lane.b32.xlu0 %v219, 120
    %v829 = vpop.permute.xlu0 %828
    %830 = vrot.lane.b32.xlu0 %v311, 120
    %v831 = vpop.permute.xlu0 %830
    %v832 = vsel %vm344, %v827, 0
    %v834 = vsel %vm344, %v829, 0
    %v836 = vsel %vm344, %v831, 0
    %838 = vmatprep.subr.mxu0 0.0
    %839 = vmatpush1.xpose.msra.mxu0 %v836
    %840 = vmatprep.subr.mxu0 0.0
    %841 = vmatpush1.xpose.msra.mxu0 0.0
    %842 = vmatprep.subr.mxu0 0.0
    %843 = vmatpush1.xpose.msra.mxu0 0.0
    %844 = vmatprep.subr.mxu0 0.0
    %845 = vmatpush1.xpose.msra.mxu0 0.0
    %846 = vmatprep.subr.mxu0 0.0
    %847 = vmatpush1.xpose.msra.mxu0 0.0
    %848 = vmatprep.subr.mxu0 0.0
    %849 = vmatpush1.xpose.msra.mxu0 0.0
    %850 = vmatprep.subr.mxu0 0.0
    %851 = vmatpush1.xpose.msra.mxu0 0.0
    %852 = vmatprep.subr.mxu0 0.0
    %853 = vmatpush1.xpose.msra.mxu0 0.0
    %854 = vmatprep.subr.mxu0 0.0
    %855 = vmatpush1.xpose.msra.mxu0 0.0
    %856 = vmatprep.subr.mxu0 0.0
    %857 = vmatpush1.xpose.msra.mxu0 0.0
    %858 = vmatprep.subr.mxu0 0.0
    %859 = vmatpush1.xpose.msra.mxu0 0.0
    %860 = vmatprep.subr.mxu0 0.0
    %861 = vmatpush1.xpose.msra.mxu0 0.0
    %862 = vmatprep.subr.mxu0 0.0
    %863 = vmatpush1.xpose.msra.mxu0 0.0
    %864 = vmatprep.subr.mxu0 0.0
    %865 = vmatpush1.xpose.msra.mxu0 0.0
    %866 = vmatprep.subr.mxu0 0.0
    %867 = vmatpush1.xpose.msra.mxu0 0.0
    %868 = vmatprep.subr.mxu0 0.0
    %869 = vmatpush1.xpose.msra.mxu0 0.0
    %870 = vmatprep.subr.mxu0 0.0
    %871 = vmatpush1.xpose.msra.mxu0 0.0
    %872 = vmatprep.subr.mxu0 0.0
    %873 = vmatpush1.xpose.msra.mxu0 0.0
    %874 = vmatprep.subr.mxu0 0.0
    %875 = vmatpush1.xpose.msra.mxu0 0.0
    %876 = vmatprep.subr.mxu0 0.0
    %877 = vmatpush1.xpose.msra.mxu0 0.0
    %878 = vmatprep.subr.mxu0 0.0
    %879 = vmatpush1.xpose.msra.mxu0 0.0
    %880 = vmatprep.subr.mxu0 0.0
    %881 = vmatpush1.xpose.msra.mxu0 0.0
    %882 = vmatprep.subr.mxu0 0.0
    %883 = vmatpush1.xpose.msra.mxu0 0.0
    %884 = vmatprep.subr.mxu0 0.0
    %885 = vmatpush1.xpose.msra.mxu0 0.0
    %886 = vmatprep.subr.mxu0 0.0
    %887 = vmatpush1.xpose.msra.mxu0 0.0
    %888 = vmatprep.subr.mxu0 0.0
    %889 = vmatpush1.xpose.msra.mxu0 0.0
    %890 = vmatprep.subr.mxu0 0.0
    %891 = vmatpush1.xpose.msra.mxu0 0.0
    %892 = vmatprep.subr.mxu0 0.0
    %893 = vmatpush1.xpose.msra.mxu0 0.0
    %894 = vmatprep.subr.mxu0 0.0
    %895 = vmatpush1.xpose.msra.mxu0 0.0
    %896 = vmatprep.subr.mxu0 0.0
    %897 = vmatpush1.xpose.msra.mxu0 0.0
    %898 = vmatprep.subr.mxu0 0.0
    %899 = vmatpush1.xpose.msra.mxu0 0.0
    %900 = vmatprep.subr.mxu0 0.0
    %901 = vmatpush1.xpose.msra.mxu0 0.0
    %902 = vmatprep.mubr.f32.mxu0 0.0
    %903 = vmatmul.mubr.f32.gmra.mrb[0].mxu0 %v832
    %v904 = vpop.f32.mrb[0].mxu0
    %v905 = vadd.f32 0.0, %v904
    %v906 = vpop.f32.mrb[0].mxu0
    %907 = vmatprep.mubr.f32.mxu0 0.0
    %908 = vmatmul.mubr.f32.gmra.mrb[0].mxu0 %v834
    %v909 = vpop.f32.mrb[0].mxu0
    %v910 = vadd.f32 0.0, %v909
    %v911 = vpop.f32.mrb[0].mxu0
    %912 = vdwg.mxu0
    %v913 = vsub.f32 %v818, %v516
    %v914 = vsub.f32 %v823, %v516
    %v915 = vsub.f32 %v905, %v520
    %v916 = vsub.f32 %v910, %v520
    %v917 = vsel %vm344, %v913, -inf
    %918 = vmax.xlane.f32.xlu0 %v917
    %v919 = vpop.xlane.xlu0 %918
    %v920 = vsel %vm344, %v914, -inf
    %921 = vmax.xlane.f32.xlu0 %v920
    %v922 = vpop.xlane.xlu0 %921
    %v923 = vsel %vm344, %v915, -inf
    %924 = vmax.xlane.f32.xlu0 %v923
    %v925 = vpop.xlane.xlu0 %924
    %v926 = vsel %vm344, %v916, -inf
    %927 = vmax.xlane.f32.xlu0 %v926
    %v928 = vpop.xlane.xlu0 %927
    %v929 = vsub.f32 %v913, %v919
    %v930 = vsub.f32 %v914, %v922
    %v931 = vsub.f32 %v915, %v925
    %v932 = vsub.f32 %v916, %v928
    %v933 = vmul.f32 %v929, 1.442695
    %v934 = vpow.pop %v933
    %v935 = vmul.f32 %v930, 1.442695
    %v936 = vpow.pop %v935
    %v937 = vmul.f32 %v931, 1.442695
    %v938 = vpow.pop %v937
    %v939 = vmul.f32 %v932, 1.442695
    %v940 = vpow.pop %v939
    %v941 = vsel %vm344, %v934, 0.0
    %942 = vadd.xlane.f32.xlu0 %v941
    %v943 = vpop.xlane.xlu0 %942
    %v944 = vsel %vm344, %v936, 0.0
    %945 = vadd.xlane.f32.xlu0 %v944
    %v946 = vpop.xlane.xlu0 %945
    %v947 = vsel %vm344, %v938, 0.0
    %948 = vadd.xlane.f32.xlu0 %v947
    %v949 = vpop.xlane.xlu0 %948
    %v950 = vsel %vm344, %v940, 0.0
    %951 = vadd.xlane.f32.xlu0 %v950
    %v952 = vpop.xlane.xlu0 %951
    %v953 = vrcp.pop %v943
    %v954 = vrcp.pop %v946
    %v955 = vrcp.pop %v949
    %v956 = vrcp.pop %v952
    %v957 = vmul.f32 %v934, %v953
    %v958 = vmul.f32 %v936, %v954
    %v959 = vmul.f32 %v938, %v955
    %v960 = vmul.f32 %v940, %v956
    %961 = vrot.lane.b32.xlu0 %v306, 88
    %v962 = vpop.permute.xlu0 %961
    %v965 = vsel %vm344, %v957, 0
    %v968 = vsel %vm344, %v958, 0
    %970 = vmatprep.subr.mxu0 0.0
    %971 = vmatpush1.msra.mxu0 %v962
    %972 = vmatprep.subr.mxu0 0.0
    %973 = vmatpush1.msra.mxu0 0.0
    %974 = vmatprep.subr.mxu0 0.0
    %975 = vmatpush1.msra.mxu0 0.0
    %976 = vmatprep.subr.mxu0 0.0
    %977 = vmatpush1.msra.mxu0 0.0
    %978 = vmatprep.subr.mxu0 0.0
    %979 = vmatpush1.msra.mxu0 0.0
    %980 = vmatprep.subr.mxu0 0.0
    %981 = vmatpush1.msra.mxu0 0.0
    %982 = vmatprep.subr.mxu0 0.0
    %983 = vmatpush1.msra.mxu0 0.0
    %984 = vmatprep.subr.mxu0 0.0
    %985 = vmatpush1.msra.mxu0 0.0
    %986 = vmatprep.subr.mxu0 0.0
    %987 = vmatpush1.msra.mxu0 0.0
    %988 = vmatprep.subr.mxu0 0.0
    %989 = vmatpush1.msra.mxu0 0.0
    %990 = vmatprep.subr.mxu0 0.0
    %991 = vmatpush1.msra.mxu0 0.0
    %992 = vmatprep.subr.mxu0 0.0
    %993 = vmatpush1.msra.mxu0 0.0
    %994 = vmatprep.subr.mxu0 0.0
    %995 = vmatpush1.msra.mxu0 0.0
    %996 = vmatprep.subr.mxu0 0.0
    %997 = vmatpush1.msra.mxu0 0.0
    %998 = vmatprep.subr.mxu0 0.0
    %999 = vmatpush1.msra.mxu0 0.0
    %1000 = vmatprep.subr.mxu0 0.0
    %1001 = vmatpush1.msra.mxu0 0.0
    %1002 = vmatprep.subr.mxu0 0.0
    %1003 = vmatpush1.msra.mxu0 0.0
    %1004 = vmatprep.subr.mxu0 0.0
    %1005 = vmatpush1.msra.mxu0 0.0
    %1006 = vmatprep.subr.mxu0 0.0
    %1007 = vmatpush1.msra.mxu0 0.0
    %1008 = vmatprep.subr.mxu0 0.0
    %1009 = vmatpush1.msra.mxu0 0.0
    %1010 = vmatprep.subr.mxu0 0.0
    %1011 = vmatpush1.msra.mxu0 0.0
    %1012 = vmatprep.subr.mxu0 0.0
    %1013 = vmatpush1.msra.mxu0 0.0
    %1014 = vmatprep.subr.mxu0 0.0
    %1015 = vmatpush1.msra.mxu0 0.0
    %1016 = vmatprep.subr.mxu0 0.0
    %1017 = vmatpush1.msra.mxu0 0.0
    %1018 = vmatprep.subr.mxu0 0.0
    %1019 = vmatpush1.msra.mxu0 0.0
    %1020 = vmatprep.subr.mxu0 0.0
    %1021 = vmatpush1.msra.mxu0 0.0
    %1022 = vmatprep.subr.mxu0 0.0
    %1023 = vmatpush1.msra.mxu0 0.0
    %1024 = vmatprep.subr.mxu0 0.0
    %1025 = vmatpush1.msra.mxu0 0.0
    %1026 = vmatprep.subr.mxu0 0.0
    %1027 = vmatpush1.msra.mxu0 0.0
    %1028 = vmatprep.subr.mxu0 0.0
    %1029 = vmatpush1.msra.mxu0 0.0
    %1030 = vmatprep.subr.mxu0 0.0
    %1031 = vmatpush1.msra.mxu0 0.0
    %1032 = vmatprep.subr.mxu0 0.0
    %1033 = vmatpush1.msra.mxu0 0.0
    %1034 = vmatprep.mubr.f32.mxu0 0.0
    %1035 = vmatmul.mubr.f32.gmra.mrb[0].mxu0 %v965
    %v1036 = vpop.f32.mrb[0].mxu0
    %v1037 = vadd.f32 0.0, %v1036
    %v1038 = vpop.f32.mrb[0].mxu0
    %1039 = vmatprep.mubr.f32.mxu0 0.0
    %1040 = vmatmul.mubr.f32.gmra.mrb[0].mxu0 %v968
    %v1041 = vpop.f32.mrb[0].mxu0
    %v1042 = vadd.f32 0.0, %v1041
    %v1043 = vpop.f32.mrb[0].mxu0
    %1044 = vdwg.mxu0
    %1045 = vrot.lane.b32.xlu0 %v311, 88
    %v1046 = vpop.permute.xlu0 %1045
    %v1049 = vsel %vm344, %v959, 0
    %v1052 = vsel %vm344, %v960, 0
    %1054 = vmatprep.subr.mxu0 0.0
    %1055 = vmatpush1.msra.mxu0 %v1046
    %1056 = vmatprep.subr.mxu0 0.0
    %1057 = vmatpush1.msra.mxu0 0.0
    %1058 = vmatprep.subr.mxu0 0.0
    %1059 = vmatpush1.msra.mxu0 0.0
    %1060 = vmatprep.subr.mxu0 0.0
    %1061 = vmatpush1.msra.mxu0 0.0
    %1062 = vmatprep.subr.mxu0 0.0
    %1063 = vmatpush1.msra.mxu0 0.0
    %1064 = vmatprep.subr.mxu0 0.0
    %1065 = vmatpush1.msra.mxu0 0.0
    %1066 = vmatprep.subr.mxu0 0.0
    %1067 = vmatpush1.msra.mxu0 0.0
    %1068 = vmatprep.subr.mxu0 0.0
    %1069 = vmatpush1.msra.mxu0 0.0
    %1070 = vmatprep.subr.mxu0 0.0
    %1071 = vmatpush1.msra.mxu0 0.0
    %1072 = vmatprep.subr.mxu0 0.0
    %1073 = vmatpush1.msra.mxu0 0.0
    %1074 = vmatprep.subr.mxu0 0.0
    %1075 = vmatpush1.msra.mxu0 0.0
    %1076 = vmatprep.subr.mxu0 0.0
    %1077 = vmatpush1.msra.mxu0 0.0
    %1078 = vmatprep.subr.mxu0 0.0
    %1079 = vmatpush1.msra.mxu0 0.0
    %1080 = vmatprep.subr.mxu0 0.0
    %1081 = vmatpush1.msra.mxu0 0.0
    %1082 = vmatprep.subr.mxu0 0.0
    %1083 = vmatpush1.msra.mxu0 0.0
    %1084 = vmatprep.subr.mxu0 0.0
    %1085 = vmatpush1.msra.mxu0 0.0
    %1086 = vmatprep.subr.mxu0 0.0
    %1087 = vmatpush1.msra.mxu0 0.0
    %1088 = vmatprep.subr.mxu0 0.0
    %1089 = vmatpush1.msra.mxu0 0.0
    %1090 = vmatprep.subr.mxu0 0.0
    %1091 = vmatpush1.msra.mxu0 0.0
    %1092 = vmatprep.subr.mxu0 0.0
    %1093 = vmatpush1.msra.mxu0 0.0
    %1094 = vmatprep.subr.mxu0 0.0
    %1095 = vmatpush1.msra.mxu0 0.0
    %1096 = vmatprep.subr.mxu0 0.0
    %1097 = vmatpush1.msra.mxu0 0.0
    %1098 = vmatprep.subr.mxu0 0.0
    %1099 = vmatpush1.msra.mxu0 0.0
    %1100 = vmatprep.subr.mxu0 0.0
    %1101 = vmatpush1.msra.mxu0 0.0
    %1102 = vmatprep.subr.mxu0 0.0
    %1103 = vmatpush1.msra.mxu0 0.0
    %1104 = vmatprep.subr.mxu0 0.0
    %1105 = vmatpush1.msra.mxu0 0.0
    %1106 = vmatprep.subr.mxu0 0.0
    %1107 = vmatpush1.msra.mxu0 0.0
    %1108 = vmatprep.subr.mxu0 0.0
    %1109 = vmatpush1.msra.mxu0 0.0
    %1110 = vmatprep.subr.mxu0 0.0
    %1111 = vmatpush1.msra.mxu0 0.0
    %1112 = vmatprep.subr.mxu0 0.0
    %1113 = vmatpush1.msra.mxu0 0.0
    %1114 = vmatprep.subr.mxu0 0.0
    %1115 = vmatpush1.msra.mxu0 0.0
    %1116 = vmatprep.subr.mxu0 0.0
    %1117 = vmatpush1.msra.mxu0 0.0
    %1118 = vmatprep.mubr.f32.mxu0 0.0
    %1119 = vmatmul.mubr.f32.gmra.mrb[0].mxu0 %v1049
    %v1120 = vpop.f32.mrb[0].mxu0
    %v1121 = vadd.f32 0.0, %v1120
    %v1122 = vpop.f32.mrb[0].mxu0
    %1123 = vmatprep.mubr.f32.mxu0 0.0
    %1124 = vmatmul.mubr.f32.gmra.mrb[0].mxu0 %v1052
    %v1125 = vpop.f32.mrb[0].mxu0
    %v1126 = vadd.f32 0.0, %v1125
    %v1127 = vpop.f32.mrb[0].mxu0
    %1128 = vdwg.mxu0
    %v1130 = vsel %vm344, %v1037, 0
    %v1133 = vsel %vm344, %v1042, 0
    %v1136 = vsel %vm344, %v1121, 0
    %v1139 = vsel %vm344, %v1126, 0
    %1141 = vmatprep.subr.mxu0 0.0
    %1142 = vmatpush1.msra.mxu0 %v341
    %1143 = vmatprep.subr.mxu0 0.0
    %1144 = vmatpush1.msra.mxu0 0.0
    %1145 = vmatprep.subr.mxu0 0.0
    %1146 = vmatpush1.msra.mxu0 0.0
    %1147 = vmatprep.subr.mxu0 0.0
    %1148 = vmatpush1.msra.mxu0 0.0
    %1149 = vmatprep.subr.mxu0 0.0
    %1150 = vmatpush1.msra.mxu0 0.0
    %1151 = vmatprep.subr.mxu0 0.0
    %1152 = vmatpush1.msra.mxu0 0.0
    %1153 = vmatprep.subr.mxu0 0.0
    %1154 = vmatpush1.msra.mxu0 0.0
    %1155 = vmatprep.subr.mxu0 0.0
    %1156 = vmatpush1.msra.mxu0 0.0
    %1157 = vmatprep.subr.mxu0 0.0
    %1158 = vmatpush1.msra.mxu0 0.0
    %1159 = vmatprep.subr.mxu0 0.0
    %1160 = vmatpush1.msra.mxu0 0.0
    %1161 = vmatprep.subr.mxu0 0.0
    %1162 = vmatpush1.msra.mxu0 0.0
    %1163 = vmatprep.subr.mxu0 0.0
    %1164 = vmatpush1.msra.mxu0 0.0
    %1165 = vmatprep.subr.mxu0 0.0
    %1166 = vmatpush1.msra.mxu0 0.0
    %1167 = vmatprep.subr.mxu0 0.0
    %1168 = vmatpush1.msra.mxu0 0.0
    %1169 = vmatprep.subr.mxu0 0.0
    %1170 = vmatpush1.msra.mxu0 0.0
    %1171 = vmatprep.subr.mxu0 0.0
    %1172 = vmatpush1.msra.mxu0 0.0
    %1173 = vmatprep.subr.mxu0 0.0
    %1174 = vmatpush1.msra.mxu0 0.0
    %1175 = vmatprep.subr.mxu0 0.0
    %1176 = vmatpush1.msra.mxu0 0.0
    %1177 = vmatprep.subr.mxu0 0.0
    %1178 = vmatpush1.msra.mxu0 0.0
    %1179 = vmatprep.subr.mxu0 0.0
    %1180 = vmatpush1.msra.mxu0 0.0
    %1181 = vmatprep.subr.mxu0 0.0
    %1182 = vmatpush1.msra.mxu0 0.0
    %1183 = vmatprep.subr.mxu0 0.0
    %1184 = vmatpush1.msra.mxu0 0.0
    %1185 = vmatprep.subr.mxu0 0.0
    %1186 = vmatpush1.msra.mxu0 0.0
    %1187 = vmatprep.subr.mxu0 0.0
    %1188 = vmatpush1.msra.mxu0 0.0
    %1189 = vmatprep.subr.mxu0 0.0
    %1190 = vmatpush1.msra.mxu0 0.0
    %1191 = vmatprep.subr.mxu0 0.0
    %1192 = vmatpush1.msra.mxu0 0.0
    %1193 = vmatprep.subr.mxu0 0.0
    %1194 = vmatpush1.msra.mxu0 0.0
    %1195 = vmatprep.subr.mxu0 0.0
    %1196 = vmatpush1.msra.mxu0 0.0
    %1197 = vmatprep.subr.mxu0 0.0
    %1198 = vmatpush1.msra.mxu0 0.0
    %1199 = vmatprep.subr.mxu0 0.0
    %1200 = vmatpush1.msra.mxu0 0.0
    %1201 = vmatprep.subr.mxu0 0.0
    %1202 = vmatpush1.msra.mxu0 0.0
    %1203 = vmatprep.subr.mxu0 0.0
    %1204 = vmatpush1.msra.mxu0 0.0
    %1205 = vmatprep.mubr.f32.mxu0 0.0
    %1206 = vmatmul.mubr.f32.gmra.mrb[0].mxu0 %v1130
    %v1207 = vpop.f32.mrb[0].mxu0
    %v1208 = vadd.f32 0.0, %v1207
    %v1209 = vpop.f32.mrb[0].mxu0
    %1210 = vmatprep.mubr.f32.mxu0 0.0
    %1211 = vmatmul.mubr.f32.gmra.mrb[0].mxu0 %v1133
    %v1212 = vpop.f32.mrb[0].mxu0
    %v1213 = vadd.f32 0.0, %v1212
    %v1214 = vpop.f32.mrb[0].mxu0
    %1215 = vmatprep.mubr.f32.mxu0 0.0
    %1216 = vmatmul.mubr.f32.gmra.mrb[0].mxu0 %v1136
    %v1217 = vpop.f32.mrb[0].mxu0
    %v1218 = vadd.f32 0.0, %v1217
    %v1219 = vpop.f32.mrb[0].mxu0
    %1220 = vmatprep.mubr.f32.mxu0 0.0
    %1221 = vmatmul.mubr.f32.gmra.mrb[0].mxu0 %v1139
    %v1222 = vpop.f32.mrb[0].mxu0
    %v1223 = vadd.f32 0.0, %v1222
    %v1224 = vpop.f32.mrb[0].mxu0
    %1225 = vdwg.mxu0
    %v1227 = vsel %vm344, %v647, 0
    %v1230 = vsel %vm344, %v652, 0
    %v1233 = vsel %vm344, %v731, 0
    %v1236 = vsel %vm344, %v736, 0
    %1238 = vmatprep.subr.mxu0 0.0
    %1239 = vmatpush1.msra.mxu0 %v340
    %1240 = vmatprep.subr.mxu0 0.0
    %1241 = vmatpush1.msra.mxu0 0.0
    %1242 = vmatprep.subr.mxu0 0.0
    %1243 = vmatpush1.msra.mxu0 0.0
    %1244 = vmatprep.subr.mxu0 0.0
    %1245 = vmatpush1.msra.mxu0 0.0
    %1246 = vmatprep.subr.mxu0 0.0
    %1247 = vmatpush1.msra.mxu0 0.0
    %1248 = vmatprep.subr.mxu0 0.0
    %1249 = vmatpush1.msra.mxu0 0.0
    %1250 = vmatprep.subr.mxu0 0.0
    %1251 = vmatpush1.msra.mxu0 0.0
    %1252 = vmatprep.subr.mxu0 0.0
    %1253 = vmatpush1.msra.mxu0 0.0
    %1254 = vmatprep.subr.mxu0 0.0
    %1255 = vmatpush1.msra.mxu0 0.0
    %1256 = vmatprep.subr.mxu0 0.0
    %1257 = vmatpush1.msra.mxu0 0.0
    %1258 = vmatprep.subr.mxu0 0.0
    %1259 = vmatpush1.msra.mxu0 0.0
    %1260 = vmatprep.subr.mxu0 0.0
    %1261 = vmatpush1.msra.mxu0 0.0
    %1262 = vmatprep.subr.mxu0 0.0
    %1263 = vmatpush1.msra.mxu0 0.0
    %1264 = vmatprep.subr.mxu0 0.0
    %1265 = vmatpush1.msra.mxu0 0.0
    %1266 = vmatprep.subr.mxu0 0.0
    %1267 = vmatpush1.msra.mxu0 0.0
    %1268 = vmatprep.subr.mxu0 0.0
    %1269 = vmatpush1.msra.mxu0 0.0
    %1270 = vmatprep.subr.mxu0 0.0
    %1271 = vmatpush1.msra.mxu0 0.0
    %1272 = vmatprep.subr.mxu0 0.0
    %1273 = vmatpush1.msra.mxu0 0.0
    %1274 = vmatprep.subr.mxu0 0.0
    %1275 = vmatpush1.msra.mxu0 0.0
    %1276 = vmatprep.subr.mxu0 0.0
    %1277 = vmatpush1.msra.mxu0 0.0
    %1278 = vmatprep.subr.mxu0 0.0
    %1279 = vmatpush1.msra.mxu0 0.0
    %1280 = vmatprep.subr.mxu0 0.0
    %1281 = vmatpush1.msra.mxu0 0.0
    %1282 = vmatprep.subr.mxu0 0.0
    %1283 = vmatpush1.msra.mxu0 0.0
    %1284 = vmatprep.subr.mxu0 0.0
    %1285 = vmatpush1.msra.mxu0 0.0
    %1286 = vmatprep.subr.mxu0 0.0
    %1287 = vmatpush1.msra.mxu0 0.0
    %1288 = vmatprep.subr.mxu0 0.0
    %1289 = vmatpush1.msra.mxu0 0.0
    %1290 = vmatprep.subr.mxu0 0.0
    %1291 = vmatpush1.msra.mxu0 0.0
    %1292 = vmatprep.subr.mxu0 0.0
    %1293 = vmatpush1.msra.mxu0 0.0
    %1294 = vmatprep.subr.mxu0 0.0
    %1295 = vmatpush1.msra.mxu0 0.0
    %1296 = vmatprep.subr.mxu0 0.0
    %1297 = vmatpush1.msra.mxu0 0.0
    %1298 = vmatprep.subr.mxu0 0.0
    %1299 = vmatpush1.msra.mxu0 0.0
    %1300 = vmatprep.subr.mxu0 0.0
    %1301 = vmatpush1.msra.mxu0 0.0
    %1302 = vmatprep.mubr.f32.mxu0 0.0
    %1303 = vmatmul.mubr.f32.gmra.mrb[0].mxu0 %v1227
    %v1304 = vpop.f32.mrb[0].mxu0
    %v1305 = vadd.f32 %v1208, %v1304
    %v1306 = vpop.f32.mrb[0].mxu0
    %1307 = vmatprep.mubr.f32.mxu0 0.0
    %1308 = vmatmul.mubr.f32.gmra.mrb[0].mxu0 %v1230
    %v1309 = vpop.f32.mrb[0].mxu0
    %v1310 = vadd.f32 %v1213, %v1309
    %v1311 = vpop.f32.mrb[0].mxu0
    %1312 = vmatprep.mubr.f32.mxu0 0.0
    %1313 = vmatmul.mubr.f32.gmra.mrb[0].mxu0 %v1233
    %v1314 = vpop.f32.mrb[0].mxu0
    %v1315 = vadd.f32 %v1218, %v1314
    %v1316 = vpop.f32.mrb[0].mxu0
    %1317 = vmatprep.mubr.f32.mxu0 0.0
    %1318 = vmatmul.mubr.f32.gmra.mrb[0].mxu0 %v1236
    %v1319 = vpop.f32.mrb[0].mxu0
    %v1320 = vadd.f32 %v1223, %v1319
    %v1321 = vpop.f32.mrb[0].mxu0
    %1322 = vdwg.mxu0
    %1323 = vrot.lane.b32.xlu0 %v204, 112
    %v1324 = vpop.permute.xlu0 %1323
    %1325 = vrot.lane.b32.xlu0 %v209, 112
    %v1326 = vpop.permute.xlu0 %1325
    %1327 = vrot.lane.b32.xlu0 %v306, 112
    %v1328 = vpop.permute.xlu0 %1327
    %v1329 = vsel %vm344, %v1324, 0
    %v1331 = vsel %vm344, %v1326, 0
    %v1333 = vsel %vm344, %v1328, 0
    %1335 = vmatprep.subr.mxu0 0.0
    %1336 = vmatpush1.xpose.msra.mxu0 %v1333
    %1337 = vmatprep.subr.mxu0 0.0
    %1338 = vmatpush1.xpose.msra.mxu0 0.0
    %1339 = vmatprep.subr.mxu0 0.0
    %1340 = vmatpush1.xpose.msra.mxu0 0.0
    %1341 = vmatprep.subr.mxu0 0.0
    %1342 = vmatpush1.xpose.msra.mxu0 0.0
    %1343 = vmatprep.subr.mxu0 0.0
    %1344 = vmatpush1.xpose.msra.mxu0 0.0
    %1345 = vmatprep.subr.mxu0 0.0
    %1346 = vmatpush1.xpose.msra.mxu0 0.0
    %1347 = vmatprep.subr.mxu0 0.0
    %1348 = vmatpush1.xpose.msra.mxu0 0.0
    %1349 = vmatprep.subr.mxu0 0.0
    %1350 = vmatpush1.xpose.msra.mxu0 0.0
    %1351 = vmatprep.subr.mxu0 0.0
    %1352 = vmatpush1.xpose.msra.mxu0 0.0
    %1353 = vmatprep.subr.mxu0 0.0
    %1354 = vmatpush1.xpose.msra.mxu0 0.0
    %1355 = vmatprep.subr.mxu0 0.0
    %1356 = vmatpush1.xpose.msra.mxu0 0.0
    %1357 = vmatprep.subr.mxu0 0.0
    %1358 = vmatpush1.xpose.msra.mxu0 0.0
    %1359 = vmatprep.subr.mxu0 0.0
    %1360 = vmatpush1.xpose.msra.mxu0 0.0
    %1361 = vmatprep.subr.mxu0 0.0
    %1362 = vmatpush1.xpose.msra.mxu0 0.0
    %1363 = vmatprep.subr.mxu0 0.0
    %1364 = vmatpush1.xpose.msra.mxu0 0.0
    %1365 = vmatprep.subr.mxu0 0.0
    %1366 = vmatpush1.xpose.msra.mxu0 0.0
    %1367 = vmatprep.subr.mxu0 0.0
    %1368 = vmatpush1.xpose.msra.mxu0 0.0
    %1369 = vmatprep.subr.mxu0 0.0
    %1370 = vmatpush1.xpose.msra.mxu0 0.0
    %1371 = vmatprep.subr.mxu0 0.0
    %1372 = vmatpush1.xpose.msra.mxu0 0.0
    %1373 = vmatprep.subr.mxu0 0.0
    %1374 = vmatpush1.xpose.msra.mxu0 0.0
    %1375 = vmatprep.subr.mxu0 0.0
    %1376 = vmatpush1.xpose.msra.mxu0 0.0
    %1377 = vmatprep.subr.mxu0 0.0
    %1378 = vmatpush1.xpose.msra.mxu0 0.0
    %1379 = vmatprep.subr.mxu0 0.0
    %1380 = vmatpush1.xpose.msra.mxu0 0.0
    %1381 = vmatprep.subr.mxu0 0.0
    %1382 = vmatpush1.xpose.msra.mxu0 0.0
    %1383 = vmatprep.subr.mxu0 0.0
    %1384 = vmatpush1.xpose.msra.mxu0 0.0
    %1385 = vmatprep.subr.mxu0 0.0
    %1386 = vmatpush1.xpose.msra.mxu0 0.0
    %1387 = vmatprep.subr.mxu0 0.0
    %1388 = vmatpush1.xpose.msra.mxu0 0.0
    %1389 = vmatprep.subr.mxu0 0.0
    %1390 = vmatpush1.xpose.msra.mxu0 0.0
    %1391 = vmatprep.subr.mxu0 0.0
    %1392 = vmatpush1.xpose.msra.mxu0 0.0
    %1393 = vmatprep.subr.mxu0 0.0
    %1394 = vmatpush1.xpose.msra.mxu0 0.0
    %1395 = vmatprep.subr.mxu0 0.0
    %1396 = vmatpush1.xpose.msra.mxu0 0.0
    %1397 = vmatprep.subr.mxu0 0.0
    %1398 = vmatpush1.xpose.msra.mxu0 0.0
    %1399 = vmatprep.mubr.f32.mxu0 0.0
    %1400 = vmatmul.mubr.f32.gmra.mrb[0].mxu0 %v1329
    %v1401 = vpop.f32.mrb[0].mxu0
    %v1402 = vadd.f32 0.0, %v1401
    %v1403 = vpop.f32.mrb[0].mxu0
    %1404 = vmatprep.mubr.f32.mxu0 0.0
    %1405 = vmatmul.mubr.f32.gmra.mrb[0].mxu0 %v1331
    %v1406 = vpop.f32.mrb[0].mxu0
    %v1407 = vadd.f32 0.0, %v1406
    %v1408 = vpop.f32.mrb[0].mxu0
    %1409 = vdwg.mxu0
    %1410 = vrot.lane.b32.xlu0 %v214, 112
    %v1411 = vpop.permute.xlu0 %1410
    %1412 = vrot.lane.b32.xlu0 %v219, 112
    %v1413 = vpop.permute.xlu0 %1412
    %1414 = vrot.lane.b32.xlu0 %v311, 112
    %v1415 = vpop.permute.xlu0 %1414
    %v1416 = vsel %vm344, %v1411, 0
    %v1418 = vsel %vm344, %v1413, 0
    %v1420 = vsel %vm344, %v1415, 0
    %1422 = vmatprep.subr.mxu0 0.0
    %1423 = vmatpush1.xpose.msra.mxu0 %v1420
    %1424 = vmatprep.subr.mxu0 0.0
    %1425 = vmatpush1.xpose.msra.mxu0 0.0
    %1426 = vmatprep.subr.mxu0 0.0
    %1427 = vmatpush1.xpose.msra.mxu0 0.0
    %1428 = vmatprep.subr.mxu0 0.0
    %1429 = vmatpush1.xpose.msra.mxu0 0.0
    %1430 = vmatprep.subr.mxu0 0.0
    %1431 = vmatpush1.xpose.msra.mxu0 0.0
    %1432 = vmatprep.subr.mxu0 0.0
    %1433 = vmatpush1.xpose.msra.mxu0 0.0
    %1434 = vmatprep.subr.mxu0 0.0
    %1435 = vmatpush1.xpose.msra.mxu0 0.0
    %1436 = vmatprep.subr.mxu0 0.0
    %1437 = vmatpush1.xpose.msra.mxu0 0.0
    %1438 = vmatprep.subr.mxu0 0.0
    %1439 = vmatpush1.xpose.msra.mxu0 0.0
    %1440 = vmatprep.subr.mxu0 0.0
    %1441 = vmatpush1.xpose.msra.mxu0 0.0
    %1442 = vmatprep.subr.mxu0 0.0
    %1443 = vmatpush1.xpose.msra.mxu0 0.0
    %1444 = vmatprep.subr.mxu0 0.0
    %1445 = vmatpush1.xpose.msra.mxu0 0.0
    %1446 = vmatprep.subr.mxu0 0.0
    %1447 = vmatpush1.xpose.msra.mxu0 0.0
    %1448 = vmatprep.subr.mxu0 0.0
    %1449 = vmatpush1.xpose.msra.mxu0 0.0
    %1450 = vmatprep.subr.mxu0 0.0
    %1451 = vmatpush1.xpose.msra.mxu0 0.0
    %1452 = vmatprep.subr.mxu0 0.0
    %1453 = vmatpush1.xpose.msra.mxu0 0.0
    %1454 = vmatprep.subr.mxu0 0.0
    %1455 = vmatpush1.xpose.msra.mxu0 0.0
    %1456 = vmatprep.subr.mxu0 0.0
    %1457 = vmatpush1.xpose.msra.mxu0 0.0
    %1458 = vmatprep.subr.mxu0 0.0
    %1459 = vmatpush1.xpose.msra.mxu0 0.0
    %1460 = vmatprep.subr.mxu0 0.0
    %1461 = vmatpush1.xpose.msra.mxu0 0.0
    %1462 = vmatprep.subr.mxu0 0.0
    %1463 = vmatpush1.xpose.msra.mxu0 0.0
    %1464 = vmatprep.subr.mxu0 0.0
    %1465 = vmatpush1.xpose.msra.mxu0 0.0
    %1466 = vmatprep.subr.mxu0 0.0
    %1467 = vmatpush1.xpose.msra.mxu0 0.0
    %1468 = vmatprep.subr.mxu0 0.0
    %1469 = vmatpush1.xpose.msra.mxu0 0.0
    %1470 = vmatprep.subr.mxu0 0.0
    %1471 = vmatpush1.xpose.msra.mxu0 0.0
    %1472 = vmatprep.subr.mxu0 0.0
    %1473 = vmatpush1.xpose.msra.mxu0 0.0
    %1474 = vmatprep.subr.mxu0 0.0
    %1475 = vmatpush1.xpose.msra.mxu0 0.0
    %1476 = vmatprep.subr.mxu0 0.0
    %1477 = vmatpush1.xpose.msra.mxu0 0.0
    %1478 = vmatprep.subr.mxu0 0.0
    %1479 = vmatpush1.xpose.msra.mxu0 0.0
    %1480 = vmatprep.subr.mxu0 0.0
    %1481 = vmatpush1.xpose.msra.mxu0 0.0
    %1482 = vmatprep.subr.mxu0 0.0
    %1483 = vmatpush1.xpose.msra.mxu0 0.0
    %1484 = vmatprep.subr.mxu0 0.0
    %1485 = vmatpush1.xpose.msra.mxu0 0.0
    %1486 = vmatprep.mubr.f32.mxu0 0.0
    %1487 = vmatmul.mubr.f32.gmra.mrb[0].mxu0 %v1416
    %v1488 = vpop.f32.mrb[0].mxu0
    %v1489 = vadd.f32 0.0, %v1488
    %v1490 = vpop.f32.mrb[0].mxu0
    %1491 = vmatprep.mubr.f32.mxu0 0.0
    %1492 = vmatmul.mubr.f32.gmra.mrb[0].mxu0 %v1418
    %v1493 = vpop.f32.mrb[0].mxu0
    %v1494 = vadd.f32 0.0, %v1493
    %v1495 = vpop.f32.mrb[0].mxu0
    %1496 = vdwg.mxu0
    %v1497 = vsub.f32 %v1402, %v516
    %v1498 = vsub.f32 %v1407, %v516
    %v1499 = vsub.f32 %v1489, %v520
    %v1500 = vsub.f32 %v1494, %v520
    %v1501 = vsel %vm344, %v1497, -inf
    %1502 = vmax.xlane.f32.xlu0 %v1501
    %v1503 = vpop.xlane.xlu0 %1502
    %v1504 = vsel %vm344, %v1498, -inf
    %1505 = vmax.xlane.f32.xlu0 %v1504
    %v1506 = vpop.xlane.xlu0 %1505
    %v1507 = vsel %vm344, %v1499, -inf
    %1508 = vmax.xlane.f32.xlu0 %v1507
    %v1509 = vpop.xlane.xlu0 %1508
    %v1510 = vsel %vm344, %v1500, -inf
    %1511 = vmax.xlane.f32.xlu0 %v1510
    %v1512 = vpop.xlane.xlu0 %1511
    %v1513 = vsub.f32 %v1497, %v1503
    %v1514 = vsub.f32 %v1498, %v1506
    %v1515 = vsub.f32 %v1499, %v1509
    %v1516 = vsub.f32 %v1500, %v1512
    %v1517 = vmul.f32 %v1513, 1.442695
    %v1518 = vpow.pop %v1517
    %v1519 = vmul.f32 %v1514, 1.442695
    %v1520 = vpow.pop %v1519
    %v1521 = vmul.f32 %v1515, 1.442695
    %v1522 = vpow.pop %v1521
    %v1523 = vmul.f32 %v1516, 1.442695
    %v1524 = vpow.pop %v1523
    %v1525 = vsel %vm344, %v1518, 0.0
    %1526 = vadd.xlane.f32.xlu0 %v1525
    %v1527 = vpop.xlane.xlu0 %1526
    %v1528 = vsel %vm344, %v1520, 0.0
    %1529 = vadd.xlane.f32.xlu0 %v1528
    %v1530 = vpop.xlane.xlu0 %1529
    %v1531 = vsel %vm344, %v1522, 0.0
    %1532 = vadd.xlane.f32.xlu0 %v1531
    %v1533 = vpop.xlane.xlu0 %1532
    %v1534 = vsel %vm344, %v1524, 0.0
    %1535 = vadd.xlane.f32.xlu0 %v1534
    %v1536 = vpop.xlane.xlu0 %1535
    %v1537 = vrcp.pop %v1527
    %v1538 = vrcp.pop %v1530
    %v1539 = vrcp.pop %v1533
    %v1540 = vrcp.pop %v1536
    %v1541 = vmul.f32 %v1518, %v1537
    %v1542 = vmul.f32 %v1520, %v1538
    %v1543 = vmul.f32 %v1522, %v1539
    %v1544 = vmul.f32 %v1524, %v1540
    %1545 = vrot.lane.b32.xlu0 %v306, 80
    %v1546 = vpop.permute.xlu0 %1545
    %v1549 = vsel %vm344, %v1541, 0
    %v1552 = vsel %vm344, %v1542, 0
    %1554 = vmatprep.subr.mxu0 0.0
    %1555 = vmatpush1.msra.mxu0 %v1546
    %1556 = vmatprep.subr.mxu0 0.0
    %1557 = vmatpush1.msra.mxu0 0.0
    %1558 = vmatprep.subr.mxu0 0.0
    %1559 = vmatpush1.msra.mxu0 0.0
    %1560 = vmatprep.subr.mxu0 0.0
    %1561 = vmatpush1.msra.mxu0 0.0
    %1562 = vmatprep.subr.mxu0 0.0
    %1563 = vmatpush1.msra.mxu0 0.0
    %1564 = vmatprep.subr.mxu0 0.0
    %1565 = vmatpush1.msra.mxu0 0.0
    %1566 = vmatprep.subr.mxu0 0.0
    %1567 = vmatpush1.msra.mxu0 0.0
    %1568 = vmatprep.subr.mxu0 0.0
    %1569 = vmatpush1.msra.mxu0 0.0
    %1570 = vmatprep.subr.mxu0 0.0
    %1571 = vmatpush1.msra.mxu0 0.0
    %1572 = vmatprep.subr.mxu0 0.0
    %1573 = vmatpush1.msra.mxu0 0.0
    %1574 = vmatprep.subr.mxu0 0.0
    %1575 = vmatpush1.msra.mxu0 0.0
    %1576 = vmatprep.subr.mxu0 0.0
    %1577 = vmatpush1.msra.mxu0 0.0
    %1578 = vmatprep.subr.mxu0 0.0
    %1579 = vmatpush1.msra.mxu0 0.0
    %1580 = vmatprep.subr.mxu0 0.0
    %1581 = vmatpush1.msra.mxu0 0.0
    %1582 = vmatprep.subr.mxu0 0.0
    %1583 = vmatpush1.msra.mxu0 0.0
    %1584 = vmatprep.subr.mxu0 0.0
    %1585 = vmatpush1.msra.mxu0 0.0
    %1586 = vmatprep.subr.mxu0 0.0
    %1587 = vmatpush1.msra.mxu0 0.0
    %1588 = vmatprep.subr.mxu0 0.0
    %1589 = vmatpush1.msra.mxu0 0.0
    %1590 = vmatprep.subr.mxu0 0.0
    %1591 = vmatpush1.msra.mxu0 0.0
    %1592 = vmatprep.subr.mxu0 0.0
    %1593 = vmatpush1.msra.mxu0 0.0
    %1594 = vmatprep.subr.mxu0 0.0
    %1595 = vmatpush1.msra.mxu0 0.0
    %1596 = vmatprep.subr.mxu0 0.0
    %1597 = vmatpush1.msra.mxu0 0.0
    %1598 = vmatprep.subr.mxu0 0.0
    %1599 = vmatpush1.msra.mxu0 0.0
    %1600 = vmatprep.subr.mxu0 0.0
    %1601 = vmatpush1.msra.mxu0 0.0
    %1602 = vmatprep.subr.mxu0 0.0
    %1603 = vmatpush1.msra.mxu0 0.0
    %1604 = vmatprep.subr.mxu0 0.0
    %1605 = vmatpush1.msra.mxu0 0.0
    %1606 = vmatprep.subr.mxu0 0.0
    %1607 = vmatpush1.msra.mxu0 0.0
    %1608 = vmatprep.subr.mxu0 0.0
    %1609 = vmatpush1.msra.mxu0 0.0
    %1610 = vmatprep.subr.mxu0 0.0
    %1611 = vmatpush1.msra.mxu0 0.0
    %1612 = vmatprep.subr.mxu0 0.0
    %1613 = vmatpush1.msra.mxu0 0.0
    %1614 = vmatprep.subr.mxu0 0.0
    %1615 = vmatpush1.msra.mxu0 0.0
    %1616 = vmatprep.subr.mxu0 0.0
    %1617 = vmatpush1.msra.mxu0 0.0
    %1618 = vmatprep.mubr.f32.mxu0 0.0
    %1619 = vmatmul.mubr.f32.gmra.mrb[0].mxu0 %v1549
    %v1620 = vpop.f32.mrb[0].mxu0
    %v1621 = vadd.f32 0.0, %v1620
    %v1622 = vpop.f32.mrb[0].mxu0
    %1623 = vmatprep.mubr.f32.mxu0 0.0
    %1624 = vmatmul.mubr.f32.gmra.mrb[0].mxu0 %v1552
    %v1625 = vpop.f32.mrb[0].mxu0
    %v1626 = vadd.f32 0.0, %v1625
    %v1627 = vpop.f32.mrb[0].mxu0
    %1628 = vdwg.mxu0
    %1629 = vrot.lane.b32.xlu0 %v311, 80
    %v1630 = vpop.permute.xlu0 %1629
    %v1633 = vsel %vm344, %v1543, 0
    %v1636 = vsel %vm344, %v1544, 0
    %1638 = vmatprep.subr.mxu0 0.0
    %1639 = vmatpush1.msra.mxu0 %v1630
    %1640 = vmatprep.subr.mxu0 0.0
    %1641 = vmatpush1.msra.mxu0 0.0
    %1642 = vmatprep.subr.mxu0 0.0
    %1643 = vmatpush1.msra.mxu0 0.0
    %1644 = vmatprep.subr.mxu0 0.0
    %1645 = vmatpush1.msra.mxu0 0.0
    %1646 = vmatprep.subr.mxu0 0.0
    %1647 = vmatpush1.msra.mxu0 0.0
    %1648 = vmatprep.subr.mxu0 0.0
    %1649 = vmatpush1.msra.mxu0 0.0
    %1650 = vmatprep.subr.mxu0 0.0
    %1651 = vmatpush1.msra.mxu0 0.0
    %1652 = vmatprep.subr.mxu0 0.0
    %1653 = vmatpush1.msra.mxu0 0.0
    %1654 = vmatprep.subr.mxu0 0.0
    %1655 = vmatpush1.msra.mxu0 0.0
    %1656 = vmatprep.subr.mxu0 0.0
    %1657 = vmatpush1.msra.mxu0 0.0
    %1658 = vmatprep.subr.mxu0 0.0
    %1659 = vmatpush1.msra.mxu0 0.0
    %1660 = vmatprep.subr.mxu0 0.0
    %1661 = vmatpush1.msra.mxu0 0.0
    %1662 = vmatprep.subr.mxu0 0.0
    %1663 = vmatpush1.msra.mxu0 0.0
    %1664 = vmatprep.subr.mxu0 0.0
    %1665 = vmatpush1.msra.mxu0 0.0
    %1666 = vmatprep.subr.mxu0 0.0
    %1667 = vmatpush1.msra.mxu0 0.0
    %1668 = vmatprep.subr.mxu0 0.0
    %1669 = vmatpush1.msra.mxu0 0.0
    %1670 = vmatprep.subr.mxu0 0.0
    %1671 = vmatpush1.msra.mxu0 0.0
    %1672 = vmatprep.subr.mxu0 0.0
    %1673 = vmatpush1.msra.mxu0 0.0
    %1674 = vmatprep.subr.mxu0 0.0
    %1675 = vmatpush1.msra.mxu0 0.0
    %1676 = vmatprep.subr.mxu0 0.0
    %1677 = vmatpush1.msra.mxu0 0.0
    %1678 = vmatprep.subr.mxu0 0.0
    %1679 = vmatpush1.msra.mxu0 0.0
    %1680 = vmatprep.subr.mxu0 0.0
    %1681 = vmatpush1.msra.mxu0 0.0
    %1682 = vmatprep.subr.mxu0 0.0
    %1683 = vmatpush1.msra.mxu0 0.0
    %1684 = vmatprep.subr.mxu0 0.0
    %1685 = vmatpush1.msra.mxu0 0.0
    %1686 = vmatprep.subr.mxu0 0.0
    %1687 = vmatpush1.msra.mxu0 0.0
    %1688 = vmatprep.subr.mxu0 0.0
    %1689 = vmatpush1.msra.mxu0 0.0
    %1690 = vmatprep.subr.mxu0 0.0
    %1691 = vmatpush1.msra.mxu0 0.0
    %1692 = vmatprep.subr.mxu0 0.0
    %1693 = vmatpush1.msra.mxu0 0.0
    %1694 = vmatprep.subr.mxu0 0.0
    %1695 = vmatpush1.msra.mxu0 0.0
    %1696 = vmatprep.subr.mxu0 0.0
    %1697 = vmatpush1.msra.mxu0 0.0
    %1698 = vmatprep.subr.mxu0 0.0
    %1699 = vmatpush1.msra.mxu0 0.0
    %1700 = vmatprep.subr.mxu0 0.0
    %1701 = vmatpush1.msra.mxu0 0.0
    %1702 = vmatprep.mubr.f32.mxu0 0.0
    %1703 = vmatmul.mubr.f32.gmra.mrb[0].mxu0 %v1633
    %v1704 = vpop.f32.mrb[0].mxu0
    %v1705 = vadd.f32 0.0, %v1704
    %v1706 = vpop.f32.mrb[0].mxu0
    %1707 = vmatprep.mubr.f32.mxu0 0.0
    %1708 = vmatmul.mubr.f32.gmra.mrb[0].mxu0 %v1636
    %v1709 = vpop.f32.mrb[0].mxu0
    %v1710 = vadd.f32 0.0, %v1709
    %v1711 = vpop.f32.mrb[0].mxu0
    %1712 = vdwg.mxu0
    %v1714 = vsel %vm344, %v1621, 0
    %v1717 = vsel %vm344, %v1626, 0
    %v1720 = vsel %vm344, %v1705, 0
    %v1723 = vsel %vm344, %v1710, 0
    %1725 = vmatprep.subr.mxu0 0.0
    %1726 = vmatpush1.msra.mxu0 %v342
    %1727 = vmatprep.subr.mxu0 0.0
    %1728 = vmatpush1.msra.mxu0 0.0
    %1729 = vmatprep.subr.mxu0 0.0
    %1730 = vmatpush1.msra.mxu0 0.0
    %1731 = vmatprep.subr.mxu0 0.0
    %1732 = vmatpush1.msra.mxu0 0.0
    %1733 = vmatprep.subr.mxu0 0.0
    %1734 = vmatpush1.msra.mxu0 0.0
    %1735 = vmatprep.subr.mxu0 0.0
    %1736 = vmatpush1.msra.mxu0 0.0
    %1737 = vmatprep.subr.mxu0 0.0
    %1738 = vmatpush1.msra.mxu0 0.0
    %1739 = vmatprep.subr.mxu0 0.0
    %1740 = vmatpush1.msra.mxu0 0.0
    %1741 = vmatprep.subr.mxu0 0.0
    %1742 = vmatpush1.msra.mxu0 0.0
    %1743 = vmatprep.subr.mxu0 0.0
    %1744 = vmatpush1.msra.mxu0 0.0
    %1745 = vmatprep.subr.mxu0 0.0
    %1746 = vmatpush1.msra.mxu0 0.0
    %1747 = vmatprep.subr.mxu0 0.0
    %1748 = vmatpush1.msra.mxu0 0.0
    %1749 = vmatprep.subr.mxu0 0.0
    %1750 = vmatpush1.msra.mxu0 0.0
    %1751 = vmatprep.subr.mxu0 0.0
    %1752 = vmatpush1.msra.mxu0 0.0
    %1753 = vmatprep.subr.mxu0 0.0
    %1754 = vmatpush1.msra.mxu0 0.0
    %1755 = vmatprep.subr.mxu0 0.0
    %1756 = vmatpush1.msra.mxu0 0.0
    %1757 = vmatprep.subr.mxu0 0.0
    %1758 = vmatpush1.msra.mxu0 0.0
    %1759 = vmatprep.subr.mxu0 0.0
    %1760 = vmatpush1.msra.mxu0 0.0
    %1761 = vmatprep.subr.mxu0 0.0
    %1762 = vmatpush1.msra.mxu0 0.0
    %1763 = vmatprep.subr.mxu0 0.0
    %1764 = vmatpush1.msra.mxu0 0.0
    %1765 = vmatprep.subr.mxu0 0.0
    %1766 = vmatpush1.msra.mxu0 0.0
    %1767 = vmatprep.subr.mxu0 0.0
    %1768 = vmatpush1.msra.mxu0 0.0
    %1769 = vmatprep.subr.mxu0 0.0
    %1770 = vmatpush1.msra.mxu0 0.0
    %1771 = vmatprep.subr.mxu0 0.0
    %1772 = vmatpush1.msra.mxu0 0.0
    %1773 = vmatprep.subr.mxu0 0.0
    %1774 = vmatpush1.msra.mxu0 0.0
    %1775 = vmatprep.subr.mxu0 0.0
    %1776 = vmatpush1.msra.mxu0 0.0
    %1777 = vmatprep.subr.mxu0 0.0
    %1778 = vmatpush1.msra.mxu0 0.0
    %1779 = vmatprep.subr.mxu0 0.0
    %1780 = vmatpush1.msra.mxu0 0.0
    %1781 = vmatprep.subr.mxu0 0.0
    %1782 = vmatpush1.msra.mxu0 0.0
    %1783 = vmatprep.subr.mxu0 0.0
    %1784 = vmatpush1.msra.mxu0 0.0
    %1785 = vmatprep.subr.mxu0 0.0
    %1786 = vmatpush1.msra.mxu0 0.0
    %1787 = vmatprep.subr.mxu0 0.0
    %1788 = vmatpush1.msra.mxu0 0.0
    %1789 = vmatprep.mubr.f32.mxu0 0.0
    %1790 = vmatmul.mubr.f32.gmra.mrb[0].mxu0 %v1714
    %v1791 = vpop.f32.mrb[0].mxu0
    %v1792 = vadd.f32 0.0, %v1791
    %v1793 = vpop.f32.mrb[0].mxu0
    %1794 = vmatprep.mubr.f32.mxu0 0.0
    %1795 = vmatmul.mubr.f32.gmra.mrb[0].mxu0 %v1717
    %v1796 = vpop.f32.mrb[0].mxu0
    %v1797 = vadd.f32 0.0, %v1796
    %v1798 = vpop.f32.mrb[0].mxu0
    %1799 = vmatprep.mubr.f32.mxu0 0.0
    %1800 = vmatmul.mubr.f32.gmra.mrb[0].mxu0 %v1720
    %v1801 = vpop.f32.mrb[0].mxu0
    %v1802 = vadd.f32 0.0, %v1801
    %v1803 = vpop.f32.mrb[0].mxu0
    %1804 = vmatprep.mubr.f32.mxu0 0.0
    %1805 = vmatmul.mubr.f32.gmra.mrb[0].mxu0 %v1723
    %v1806 = vpop.f32.mrb[0].mxu0
    %v1807 = vadd.f32 0.0, %v1806
    %v1808 = vpop.f32.mrb[0].mxu0
    %1809 = vdwg.mxu0
    %v1810 = vadd.f32 %v1305, %v1792
    %v1811 = vadd.f32 %v1310, %v1797
    %v1812 = vadd.f32 %v1315, %v1802
    %v1813 = vadd.f32 %v1320, %v1807
    %1814 = vrot.lane.b32.xlu0 %v204, 104
    %v1815 = vpop.permute.xlu0 %1814
    %1816 = vrot.lane.b32.xlu0 %v209, 104
    %v1817 = vpop.permute.xlu0 %1816
    %1818 = vrot.lane.b32.xlu0 %v306, 104
    %v1819 = vpop.permute.xlu0 %1818
    %v1820 = vsel %vm344, %v1815, 0
    %v1822 = vsel %vm344, %v1817, 0
    %v1824 = vsel %vm344, %v1819, 0
    %1826 = vmatprep.subr.mxu0 0.0
    %1827 = vmatpush1.xpose.msra.mxu0 %v1824
    %1828 = vmatprep.subr.mxu0 0.0
    %1829 = vmatpush1.xpose.msra.mxu0 0.0
    %1830 = vmatprep.subr.mxu0 0.0
    %1831 = vmatpush1.xpose.msra.mxu0 0.0
    %1832 = vmatprep.subr.mxu0 0.0
    %1833 = vmatpush1.xpose.msra.mxu0 0.0
    %1834 = vmatprep.subr.mxu0 0.0
    %1835 = vmatpush1.xpose.msra.mxu0 0.0
    %1836 = vmatprep.subr.mxu0 0.0
    %1837 = vmatpush1.xpose.msra.mxu0 0.0
    %1838 = vmatprep.subr.mxu0 0.0
    %1839 = vmatpush1.xpose.msra.mxu0 0.0
    %1840 = vmatprep.subr.mxu0 0.0
    %1841 = vmatpush1.xpose.msra.mxu0 0.0
    %1842 = vmatprep.subr.mxu0 0.0
    %1843 = vmatpush1.xpose.msra.mxu0 0.0
    %1844 = vmatprep.subr.mxu0 0.0
    %1845 = vmatpush1.xpose.msra.mxu0 0.0
    %1846 = vmatprep.subr.mxu0 0.0
    %1847 = vmatpush1.xpose.msra.mxu0 0.0
    %1848 = vmatprep.subr.mxu0 0.0
    %1849 = vmatpush1.xpose.msra.mxu0 0.0
    %1850 = vmatprep.subr.mxu0 0.0
    %1851 = vmatpush1.xpose.msra.mxu0 0.0
    %1852 = vmatprep.subr.mxu0 0.0
    %1853 = vmatpush1.xpose.msra.mxu0 0.0
    %1854 = vmatprep.subr.mxu0 0.0
    %1855 = vmatpush1.xpose.msra.mxu0 0.0
    %1856 = vmatprep.subr.mxu0 0.0
    %1857 = vmatpush1.xpose.msra.mxu0 0.0
    %1858 = vmatprep.subr.mxu0 0.0
    %1859 = vmatpush1.xpose.msra.mxu0 0.0
    %1860 = vmatprep.subr.mxu0 0.0
    %1861 = vmatpush1.xpose.msra.mxu0 0.0
    %1862 = vmatprep.subr.mxu0 0.0
    %1863 = vmatpush1.xpose.msra.mxu0 0.0
    %1864 = vmatprep.subr.mxu0 0.0
    %1865 = vmatpush1.xpose.msra.mxu0 0.0
    %1866 = vmatprep.subr.mxu0 0.0
    %1867 = vmatpush1.xpose.msra.mxu0 0.0
    %1868 = vmatprep.subr.mxu0 0.0
    %1869 = vmatpush1.xpose.msra.mxu0 0.0
    %1870 = vmatprep.subr.mxu0 0.0
    %1871 = vmatpush1.xpose.msra.mxu0 0.0
    %1872 = vmatprep.subr.mxu0 0.0
    %1873 = vmatpush1.xpose.msra.mxu0 0.0
    %1874 = vmatprep.subr.mxu0 0.0
    %1875 = vmatpush1.xpose.msra.mxu0 0.0
    %1876 = vmatprep.subr.mxu0 0.0
    %1877 = vmatpush1.xpose.msra.mxu0 0.0
    %1878 = vmatprep.subr.mxu0 0.0
    %1879 = vmatpush1.xpose.msra.mxu0 0.0
    %1880 = vmatprep.subr.mxu0 0.0
    %1881 = vmatpush1.xpose.msra.mxu0 0.0
    %1882 = vmatprep.subr.mxu0 0.0
    %1883 = vmatpush1.xpose.msra.mxu0 0.0
    %1884 = vmatprep.subr.mxu0 0.0
    %1885 = vmatpush1.xpose.msra.mxu0 0.0
    %1886 = vmatprep.subr.mxu0 0.0
    %1887 = vmatpush1.xpose.msra.mxu0 0.0
    %1888 = vmatprep.subr.mxu0 0.0
    %1889 = vmatpush1.xpose.msra.mxu0 0.0
    %1890 = vmatprep.mubr.f32.mxu0 0.0
    %1891 = vmatmul.mubr.f32.gmra.mrb[0].mxu0 %v1820
    %v1892 = vpop.f32.mrb[0].mxu0
    %v1893 = vadd.f32 0.0, %v1892
    %v1894 = vpop.f32.mrb[0].mxu0
    %1895 = vmatprep.mubr.f32.mxu0 0.0
    %1896 = vmatmul.mubr.f32.gmra.mrb[0].mxu0 %v1822
    %v1897 = vpop.f32.mrb[0].mxu0
    %v1898 = vadd.f32 0.0, %v1897
    %v1899 = vpop.f32.mrb[0].mxu0
    %1900 = vdwg.mxu0
    %1901 = vrot.lane.b32.xlu0 %v214, 104
    %v1902 = vpop.permute.xlu0 %1901
    %1903 = vrot.lane.b32.xlu0 %v219, 104
    %v1904 = vpop.permute.xlu0 %1903
    %1905 = vrot.lane.b32.xlu0 %v311, 104
    %v1906 = vpop.permute.xlu0 %1905
    %v1907 = vsel %vm344, %v1902, 0
    %v1909 = vsel %vm344, %v1904, 0
    %v1911 = vsel %vm344, %v1906, 0
    %1913 = vmatprep.subr.mxu0 0.0
    %1914 = vmatpush1.xpose.msra.mxu0 %v1911
    %1915 = vmatprep.subr.mxu0 0.0
    %1916 = vmatpush1.xpose.msra.mxu0 0.0
    %1917 = vmatprep.subr.mxu0 0.0
    %1918 = vmatpush1.xpose.msra.mxu0 0.0
    %1919 = vmatprep.subr.mxu0 0.0
    %1920 = vmatpush1.xpose.msra.mxu0 0.0
    %1921 = vmatprep.subr.mxu0 0.0
    %1922 = vmatpush1.xpose.msra.mxu0 0.0
    %1923 = vmatprep.subr.mxu0 0.0
    %1924 = vmatpush1.xpose.msra.mxu0 0.0
    %1925 = vmatprep.subr.mxu0 0.0
    %1926 = vmatpush1.xpose.msra.mxu0 0.0
    %1927 = vmatprep.subr.mxu0 0.0
    %1928 = vmatpush1.xpose.msra.mxu0 0.0
    %1929 = vmatprep.subr.mxu0 0.0
    %1930 = vmatpush1.xpose.msra.mxu0 0.0
    %1931 = vmatprep.subr.mxu0 0.0
    %1932 = vmatpush1.xpose.msra.mxu0 0.0
    %1933 = vmatprep.subr.mxu0 0.0
    %1934 = vmatpush1.xpose.msra.mxu0 0.0
    %1935 = vmatprep.subr.mxu0 0.0
    %1936 = vmatpush1.xpose.msra.mxu0 0.0
    %1937 = vmatprep.subr.mxu0 0.0
    %1938 = vmatpush1.xpose.msra.mxu0 0.0
    %1939 = vmatprep.subr.mxu0 0.0
    %1940 = vmatpush1.xpose.msra.mxu0 0.0
    %1941 = vmatprep.subr.mxu0 0.0
    %1942 = vmatpush1.xpose.msra.mxu0 0.0
    %1943 = vmatprep.subr.mxu0 0.0
    %1944 = vmatpush1.xpose.msra.mxu0 0.0
    %1945 = vmatprep.subr.mxu0 0.0
    %1946 = vmatpush1.xpose.msra.mxu0 0.0
    %1947 = vmatprep.subr.mxu0 0.0
    %1948 = vmatpush1.xpose.msra.mxu0 0.0
    %1949 = vmatprep.subr.mxu0 0.0
    %1950 = vmatpush1.xpose.msra.mxu0 0.0
    %1951 = vmatprep.subr.mxu0 0.0
    %1952 = vmatpush1.xpose.msra.mxu0 0.0
    %1953 = vmatprep.subr.mxu0 0.0
    %1954 = vmatpush1.xpose.msra.mxu0 0.0
    %1955 = vmatprep.subr.mxu0 0.0
    %1956 = vmatpush1.xpose.msra.mxu0 0.0
    %1957 = vmatprep.subr.mxu0 0.0
    %1958 = vmatpush1.xpose.msra.mxu0 0.0
    %1959 = vmatprep.subr.mxu0 0.0
    %1960 = vmatpush1.xpose.msra.mxu0 0.0
    %1961 = vmatprep.subr.mxu0 0.0
    %1962 = vmatpush1.xpose.msra.mxu0 0.0
    %1963 = vmatprep.subr.mxu0 0.0
    %1964 = vmatpush1.xpose.msra.mxu0 0.0
    %1965 = vmatprep.subr.mxu0 0.0
    %1966 = vmatpush1.xpose.msra.mxu0 0.0
    %1967 = vmatprep.subr.mxu0 0.0
    %1968 = vmatpush1.xpose.msra.mxu0 0.0
    %1969 = vmatprep.subr.mxu0 0.0
    %1970 = vmatpush1.xpose.msra.mxu0 0.0
    %1971 = vmatprep.subr.mxu0 0.0
    %1972 = vmatpush1.xpose.msra.mxu0 0.0
    %1973 = vmatprep.subr.mxu0 0.0
    %1974 = vmatpush1.xpose.msra.mxu0 0.0
    %1975 = vmatprep.subr.mxu0 0.0
    %1976 = vmatpush1.xpose.msra.mxu0 0.0
    %1977 = vmatprep.mubr.f32.mxu0 0.0
    %1978 = vmatmul.mubr.f32.gmra.mrb[0].mxu0 %v1907
    %v1979 = vpop.f32.mrb[0].mxu0
    %v1980 = vadd.f32 0.0, %v1979
    %v1981 = vpop.f32.mrb[0].mxu0
    %1982 = vmatprep.mubr.f32.mxu0 0.0
    %1983 = vmatmul.mubr.f32.gmra.mrb[0].mxu0 %v1909
    %v1984 = vpop.f32.mrb[0].mxu0
    %v1985 = vadd.f32 0.0, %v1984
    %v1986 = vpop.f32.mrb[0].mxu0
    %1987 = vdwg.mxu0
    %v1988 = vsub.f32 %v1893, %v516
    %v1989 = vsub.f32 %v1898, %v516
    %v1990 = vsub.f32 %v1980, %v520
    %v1991 = vsub.f32 %v1985, %v520
    %v1992 = vsel %vm344, %v1988, -inf
    %1993 = vmax.xlane.f32.xlu0 %v1992
    %v1994 = vpop.xlane.xlu0 %1993
    %v1995 = vsel %vm344, %v1989, -inf
    %1996 = vmax.xlane.f32.xlu0 %v1995
    %v1997 = vpop.xlane.xlu0 %1996
    %v1998 = vsel %vm344, %v1990, -inf
    %1999 = vmax.xlane.f32.xlu0 %v1998
    %v2000 = vpop.xlane.xlu0 %1999
    %v2001 = vsel %vm344, %v1991, -inf
    %2002 = vmax.xlane.f32.xlu0 %v2001
    %v2003 = vpop.xlane.xlu0 %2002
    %v2004 = vsub.f32 %v1988, %v1994
    %v2005 = vsub.f32 %v1989, %v1997
    %v2006 = vsub.f32 %v1990, %v2000
    %v2007 = vsub.f32 %v1991, %v2003
    %v2008 = vmul.f32 %v2004, 1.442695
    %v2009 = vpow.pop %v2008
    %v2010 = vmul.f32 %v2005, 1.442695
    %v2011 = vpow.pop %v2010
    %v2012 = vmul.f32 %v2006, 1.442695
    %v2013 = vpow.pop %v2012
    %v2014 = vmul.f32 %v2007, 1.442695
    %v2015 = vpow.pop %v2014
    %v2016 = vsel %vm344, %v2009, 0.0
    %2017 = vadd.xlane.f32.xlu0 %v2016
    %v2018 = vpop.xlane.xlu0 %2017
    %v2019 = vsel %vm344, %v2011, 0.0
    %2020 = vadd.xlane.f32.xlu0 %v2019
    %v2021 = vpop.xlane.xlu0 %2020
    %v2022 = vsel %vm344, %v2013, 0.0
    %2023 = vadd.xlane.f32.xlu0 %v2022
    %v2024 = vpop.xlane.xlu0 %2023
    %v2025 = vsel %vm344, %v2015, 0.0
    %2026 = vadd.xlane.f32.xlu0 %v2025
    %v2027 = vpop.xlane.xlu0 %2026
    %v2028 = vrcp.pop %v2018
    %v2029 = vrcp.pop %v2021
    %v2030 = vrcp.pop %v2024
    %v2031 = vrcp.pop %v2027
    %v2032 = vmul.f32 %v2009, %v2028
    %v2033 = vmul.f32 %v2011, %v2029
    %v2034 = vmul.f32 %v2013, %v2030
    %v2035 = vmul.f32 %v2015, %v2031
    %2036 = vrot.lane.b32.xlu0 %v306, 72
    %v2037 = vpop.permute.xlu0 %2036
    %v2040 = vsel %vm344, %v2032, 0
    %v2043 = vsel %vm344, %v2033, 0
    %2045 = vmatprep.subr.mxu0 0.0
    %2046 = vmatpush1.msra.mxu0 %v2037
    %2047 = vmatprep.subr.mxu0 0.0
    %2048 = vmatpush1.msra.mxu0 0.0
    %2049 = vmatprep.subr.mxu0 0.0
    %2050 = vmatpush1.msra.mxu0 0.0
    %2051 = vmatprep.subr.mxu0 0.0
    %2052 = vmatpush1.msra.mxu0 0.0
    %2053 = vmatprep.subr.mxu0 0.0
    %2054 = vmatpush1.msra.mxu0 0.0
    %2055 = vmatprep.subr.mxu0 0.0
    %2056 = vmatpush1.msra.mxu0 0.0
    %2057 = vmatprep.subr.mxu0 0.0
    %2058 = vmatpush1.msra.mxu0 0.0
    %2059 = vmatprep.subr.mxu0 0.0
    %2060 = vmatpush1.msra.mxu0 0.0
    %2061 = vmatprep.subr.mxu0 0.0
    %2062 = vmatpush1.msra.mxu0 0.0
    %2063 = vmatprep.subr.mxu0 0.0
    %2064 = vmatpush1.msra.mxu0 0.0
    %2065 = vmatprep.subr.mxu0 0.0
    %2066 = vmatpush1.msra.mxu0 0.0
    %2067 = vmatprep.subr.mxu0 0.0
    %2068 = vmatpush1.msra.mxu0 0.0
    %2069 = vmatprep.subr.mxu0 0.0
    %2070 = vmatpush1.msra.mxu0 0.0
    %2071 = vmatprep.subr.mxu0 0.0
    %2072 = vmatpush1.msra.mxu0 0.0
    %2073 = vmatprep.subr.mxu0 0.0
    %2074 = vmatpush1.msra.mxu0 0.0
    %2075 = vmatprep.subr.mxu0 0.0
    %2076 = vmatpush1.msra.mxu0 0.0
    %2077 = vmatprep.subr.mxu0 0.0
    %2078 = vmatpush1.msra.mxu0 0.0
    %2079 = vmatprep.subr.mxu0 0.0
    %2080 = vmatpush1.msra.mxu0 0.0
    %2081 = vmatprep.subr.mxu0 0.0
    %2082 = vmatpush1.msra.mxu0 0.0
    %2083 = vmatprep.subr.mxu0 0.0
    %2084 = vmatpush1.msra.mxu0 0.0
    %2085 = vmatprep.subr.mxu0 0.0
    %2086 = vmatpush1.msra.mxu0 0.0
    %2087 = vmatprep.subr.mxu0 0.0
    %2088 = vmatpush1.msra.mxu0 0.0
    %2089 = vmatprep.subr.mxu0 0.0
    %2090 = vmatpush1.msra.mxu0 0.0
    %2091 = vmatprep.subr.mxu0 0.0
    %2092 = vmatpush1.msra.mxu0 0.0
    %2093 = vmatprep.subr.mxu0 0.0
    %2094 = vmatpush1.msra.mxu0 0.0
    %2095 = vmatprep.subr.mxu0 0.0
    %2096 = vmatpush1.msra.mxu0 0.0
    %2097 = vmatprep.subr.mxu0 0.0
    %2098 = vmatpush1.msra.mxu0 0.0
    %2099 = vmatprep.subr.mxu0 0.0
    %2100 = vmatpush1.msra.mxu0 0.0
    %2101 = vmatprep.subr.mxu0 0.0
    %2102 = vmatpush1.msra.mxu0 0.0
    %2103 = vmatprep.subr.mxu0 0.0
    %2104 = vmatpush1.msra.mxu0 0.0
    %2105 = vmatprep.subr.mxu0 0.0
    %2106 = vmatpush1.msra.mxu0 0.0
    %2107 = vmatprep.subr.mxu0 0.0
    %2108 = vmatpush1.msra.mxu0 0.0
    %2109 = vmatprep.mubr.f32.mxu0 0.0
    %2110 = vmatmul.mubr.f32.gmra.mrb[0].mxu0 %v2040
    %v2111 = vpop.f32.mrb[0].mxu0
    %v2112 = vadd.f32 0.0, %v2111
    %v2113 = vpop.f32.mrb[0].mxu0
    %2114 = vmatprep.mubr.f32.mxu0 0.0
    %2115 = vmatmul.mubr.f32.gmra.mrb[0].mxu0 %v2043
    %v2116 = vpop.f32.mrb[0].mxu0
    %v2117 = vadd.f32 0.0, %v2116
    %v2118 = vpop.f32.mrb[0].mxu0
    %2119 = vdwg.mxu0
    %2120 = vrot.lane.b32.xlu0 %v311, 72
    %v2121 = vpop.permute.xlu0 %2120
    %v2124 = vsel %vm344, %v2034, 0
    %v2127 = vsel %vm344, %v2035, 0
    %2129 = vmatprep.subr.mxu0 0.0
    %2130 = vmatpush1.msra.mxu0 %v2121
    %2131 = vmatprep.subr.mxu0 0.0
    %2132 = vmatpush1.msra.mxu0 0.0
    %2133 = vmatprep.subr.mxu0 0.0
    %2134 = vmatpush1.msra.mxu0 0.0
    %2135 = vmatprep.subr.mxu0 0.0
    %2136 = vmatpush1.msra.mxu0 0.0
    %2137 = vmatprep.subr.mxu0 0.0
    %2138 = vmatpush1.msra.mxu0 0.0
    %2139 = vmatprep.subr.mxu0 0.0
    %2140 = vmatpush1.msra.mxu0 0.0
    %2141 = vmatprep.subr.mxu0 0.0
    %2142 = vmatpush1.msra.mxu0 0.0
    %2143 = vmatprep.subr.mxu0 0.0
    %2144 = vmatpush1.msra.mxu0 0.0
    %2145 = vmatprep.subr.mxu0 0.0
    %2146 = vmatpush1.msra.mxu0 0.0
    %2147 = vmatprep.subr.mxu0 0.0
    %2148 = vmatpush1.msra.mxu0 0.0
    %2149 = vmatprep.subr.mxu0 0.0
    %2150 = vmatpush1.msra.mxu0 0.0
    %2151 = vmatprep.subr.mxu0 0.0
    %2152 = vmatpush1.msra.mxu0 0.0
    %2153 = vmatprep.subr.mxu0 0.0
    %2154 = vmatpush1.msra.mxu0 0.0
    %2155 = vmatprep.subr.mxu0 0.0
    %2156 = vmatpush1.msra.mxu0 0.0
    %2157 = vmatprep.subr.mxu0 0.0
    %2158 = vmatpush1.msra.mxu0 0.0
    %2159 = vmatprep.subr.mxu0 0.0
    %2160 = vmatpush1.msra.mxu0 0.0
    %2161 = vmatprep.subr.mxu0 0.0
    %2162 = vmatpush1.msra.mxu0 0.0
    %2163 = vmatprep.subr.mxu0 0.0
    %2164 = vmatpush1.msra.mxu0 0.0
    %2165 = vmatprep.subr.mxu0 0.0
    %2166 = vmatpush1.msra.mxu0 0.0
    %2167 = vmatprep.subr.mxu0 0.0
    %2168 = vmatpush1.msra.mxu0 0.0
    %2169 = vmatprep.subr.mxu0 0.0
    %2170 = vmatpush1.msra.mxu0 0.0
    %2171 = vmatprep.subr.mxu0 0.0
    %2172 = vmatpush1.msra.mxu0 0.0
    %2173 = vmatprep.subr.mxu0 0.0
    %2174 = vmatpush1.msra.mxu0 0.0
    %2175 = vmatprep.subr.mxu0 0.0
    %2176 = vmatpush1.msra.mxu0 0.0
    %2177 = vmatprep.subr.mxu0 0.0
    %2178 = vmatpush1.msra.mxu0 0.0
    %2179 = vmatprep.subr.mxu0 0.0
    %2180 = vmatpush1.msra.mxu0 0.0
    %2181 = vmatprep.subr.mxu0 0.0
    %2182 = vmatpush1.msra.mxu0 0.0
    %2183 = vmatprep.subr.mxu0 0.0
    %2184 = vmatpush1.msra.mxu0 0.0
    %2185 = vmatprep.subr.mxu0 0.0
    %2186 = vmatpush1.msra.mxu0 0.0
    %2187 = vmatprep.subr.mxu0 0.0
    %2188 = vmatpush1.msra.mxu0 0.0
    %2189 = vmatprep.subr.mxu0 0.0
    %2190 = vmatpush1.msra.mxu0 0.0
    %2191 = vmatprep.subr.mxu0 0.0
    %2192 = vmatpush1.msra.mxu0 0.0
    %2193 = vmatprep.mubr.f32.mxu0 0.0
    %2194 = vmatmul.mubr.f32.gmra.mrb[0].mxu0 %v2124
    %v2195 = vpop.f32.mrb[0].mxu0
    %v2196 = vadd.f32 0.0, %v2195
    %v2197 = vpop.f32.mrb[0].mxu0
    %2198 = vmatprep.mubr.f32.mxu0 0.0
    %2199 = vmatmul.mubr.f32.gmra.mrb[0].mxu0 %v2127
    %v2200 = vpop.f32.mrb[0].mxu0
    %v2201 = vadd.f32 0.0, %v2200
    %v2202 = vpop.f32.mrb[0].mxu0
    %2203 = vdwg.mxu0
    %v2205 = vsel %vm344, %v2112, 0
    %v2208 = vsel %vm344, %v2117, 0
    %v2211 = vsel %vm344, %v2196, 0
    %v2214 = vsel %vm344, %v2201, 0
    %2216 = vmatprep.subr.mxu0 0.0
    %2217 = vmatpush1.msra.mxu0 %v343
    %2218 = vmatprep.subr.mxu0 0.0
    %2219 = vmatpush1.msra.mxu0 0.0
    %2220 = vmatprep.subr.mxu0 0.0
    %2221 = vmatpush1.msra.mxu0 0.0
    %2222 = vmatprep.subr.mxu0 0.0
    %2223 = vmatpush1.msra.mxu0 0.0
    %2224 = vmatprep.subr.mxu0 0.0
    %2225 = vmatpush1.msra.mxu0 0.0
    %2226 = vmatprep.subr.mxu0 0.0
    %2227 = vmatpush1.msra.mxu0 0.0
    %2228 = vmatprep.subr.mxu0 0.0
    %2229 = vmatpush1.msra.mxu0 0.0
    %2230 = vmatprep.subr.mxu0 0.0
    %2231 = vmatpush1.msra.mxu0 0.0
    %2232 = vmatprep.subr.mxu0 0.0
    %2233 = vmatpush1.msra.mxu0 0.0
    %2234 = vmatprep.subr.mxu0 0.0
    %2235 = vmatpush1.msra.mxu0 0.0
    %2236 = vmatprep.subr.mxu0 0.0
    %2237 = vmatpush1.msra.mxu0 0.0
    %2238 = vmatprep.subr.mxu0 0.0
    %2239 = vmatpush1.msra.mxu0 0.0
    %2240 = vmatprep.subr.mxu0 0.0
    %2241 = vmatpush1.msra.mxu0 0.0
    %2242 = vmatprep.subr.mxu0 0.0
    %2243 = vmatpush1.msra.mxu0 0.0
    %2244 = vmatprep.subr.mxu0 0.0
    %2245 = vmatpush1.msra.mxu0 0.0
    %2246 = vmatprep.subr.mxu0 0.0
    %2247 = vmatpush1.msra.mxu0 0.0
    %2248 = vmatprep.subr.mxu0 0.0
    %2249 = vmatpush1.msra.mxu0 0.0
    %2250 = vmatprep.subr.mxu0 0.0
    %2251 = vmatpush1.msra.mxu0 0.0
    %2252 = vmatprep.subr.mxu0 0.0
    %2253 = vmatpush1.msra.mxu0 0.0
    %2254 = vmatprep.subr.mxu0 0.0
    %2255 = vmatpush1.msra.mxu0 0.0
    %2256 = vmatprep.subr.mxu0 0.0
    %2257 = vmatpush1.msra.mxu0 0.0
    %2258 = vmatprep.subr.mxu0 0.0
    %2259 = vmatpush1.msra.mxu0 0.0
    %2260 = vmatprep.subr.mxu0 0.0
    %2261 = vmatpush1.msra.mxu0 0.0
    %2262 = vmatprep.subr.mxu0 0.0
    %2263 = vmatpush1.msra.mxu0 0.0
    %2264 = vmatprep.subr.mxu0 0.0
    %2265 = vmatpush1.msra.mxu0 0.0
    %2266 = vmatprep.subr.mxu0 0.0
    %2267 = vmatpush1.msra.mxu0 0.0
    %2268 = vmatprep.subr.mxu0 0.0
    %2269 = vmatpush1.msra.mxu0 0.0
    %2270 = vmatprep.subr.mxu0 0.0
    %2271 = vmatpush1.msra.mxu0 0.0
    %2272 = vmatprep.subr.mxu0 0.0
    %2273 = vmatpush1.msra.mxu0 0.0
    %2274 = vmatprep.subr.mxu0 0.0
    %2275 = vmatpush1.msra.mxu0 0.0
    %2276 = vmatprep.subr.mxu0 0.0
    %2277 = vmatpush1.msra.mxu0 0.0
    %2278 = vmatprep.subr.mxu0 0.0
    %2279 = vmatpush1.msra.mxu0 0.0
    %2280 = vmatprep.mubr.f32.mxu0 0.0
    %2281 = vmatmul.mubr.f32.gmra.mrb[0].mxu0 %v2205
    %v2282 = vpop.f32.mrb[0].mxu0
    %v2283 = vadd.f32 0.0, %v2282
    %v2284 = vpop.f32.mrb[0].mxu0
    %2285 = vmatprep.mubr.f32.mxu0 0.0
    %2286 = vmatmul.mubr.f32.gmra.mrb[0].mxu0 %v2208
    %v2287 = vpop.f32.mrb[0].mxu0
    %v2288 = vadd.f32 0.0, %v2287
    %v2289 = vpop.f32.mrb[0].mxu0
    %2290 = vmatprep.mubr.f32.mxu0 0.0
    %2291 = vmatmul.mubr.f32.gmra.mrb[0].mxu0 %v2211
    %v2292 = vpop.f32.mrb[0].mxu0
    %v2293 = vadd.f32 0.0, %v2292
    %v2294 = vpop.f32.mrb[0].mxu0
    %2295 = vmatprep.mubr.f32.mxu0 0.0
    %2296 = vmatmul.mubr.f32.gmra.mrb[0].mxu0 %v2214
    %v2297 = vpop.f32.mrb[0].mxu0
    %v2298 = vadd.f32 0.0, %v2297
    %v2299 = vpop.f32.mrb[0].mxu0
    %2300 = vdwg.mxu0
    %v2301 = vadd.f32 %v1810, %v2283
    %v2302 = vadd.f32 %v1811, %v2288
    %v2303 = vadd.f32 %v1812, %v2293
    %v2304 = vadd.f32 %v1813, %v2298
    %v2305 = vld [vmem:[%s8] sm:$0x1]
    %v2307 = vlaneseq
    %v2308 = vshrl.u32 %v2307, 7
    %v2309 = vsub.s32 0, %v2308
    %v2310 = vrot.slane %v2305, %v2309
    %v2312 = vadd.f32 %v2301, %v2310
    %v2313 = vadd.f32 %v2302, %v2310
    %v2314 = vadd.f32 %v2303, %v2310
    %v2315 = vadd.f32 %v2304, %v2310
    %v2316 = vadd.f32 %v2312, %v107
    %v2317 = vadd.f32 %v2313, %v108
    %v2318 = vadd.f32 %v2314, %v109
    %v2319 = vadd.f32 %v2315, %v110
    %v2320 = vsel %vm124, %v2316, 0.0
    %2321 = vadd.xlane.f32.xlu0 %v2320
    %v2322 = vpop.xlane.xlu0 %2321
    %v2323 = vsel %vm124, %v2317, 0.0
    %2324 = vadd.xlane.f32.xlu0 %v2323
    %v2325 = vpop.xlane.xlu0 %2324
    %v2326 = vsel %vm124, %v2318, 0.0
    %2327 = vadd.xlane.f32.xlu0 %v2326
    %v2328 = vpop.xlane.xlu0 %2327
    %v2329 = vsel %vm124, %v2319, 0.0
    %2330 = vadd.xlane.f32.xlu0 %v2329
    %v2331 = vpop.xlane.xlu0 %2330
    %v2332 = vrcp.pop 32.0
    %v2333 = vmul.f32 %v2322, %v2332
    %v2334 = vmul.f32 %v2325, %v2332
    %v2335 = vmul.f32 %v2328, %v2332
    %v2336 = vmul.f32 %v2331, %v2332
    %v2337 = vsub.f32 %v2316, %v2333
    %v2338 = vsub.f32 %v2317, %v2334
    %v2339 = vsub.f32 %v2318, %v2335
    %v2340 = vsub.f32 %v2319, %v2336
    %v2341 = vmul.f32 %v2337, %v2337
    %v2342 = vmul.f32 %v2338, %v2338
    %v2343 = vmul.f32 %v2339, %v2339
    %v2344 = vmul.f32 %v2340, %v2340
    %v2345 = vsel %vm124, %v2341, 0.0
    %2346 = vadd.xlane.f32.xlu0 %v2345
    %v2347 = vpop.xlane.xlu0 %2346
    %v2348 = vsel %vm124, %v2342, 0.0
    %2349 = vadd.xlane.f32.xlu0 %v2348
    %v2350 = vpop.xlane.xlu0 %2349
    %v2351 = vsel %vm124, %v2343, 0.0
    %2352 = vadd.xlane.f32.xlu0 %v2351
    %v2353 = vpop.xlane.xlu0 %2352
    %v2354 = vsel %vm124, %v2344, 0.0
    %2355 = vadd.xlane.f32.xlu0 %v2354
    %v2356 = vpop.xlane.xlu0 %2355
    %v2357 = vmul.f32 %v2347, %v2332
    %v2358 = vmul.f32 %v2350, %v2332
    %v2359 = vmul.f32 %v2353, %v2332
    %v2360 = vmul.f32 %v2356, %v2332
    %v2361 = vadd.f32 %v2357, 1e-05
    %v2362 = vadd.f32 %v2358, 1e-05
    %v2363 = vadd.f32 %v2359, 1e-05
    %v2364 = vadd.f32 %v2360, 1e-05
    %v2365 = vrsqrt.pop %v2361
    %v2366 = vrsqrt.pop %v2362
    %v2367 = vrsqrt.pop %v2363
    %v2368 = vrsqrt.pop %v2364
    %v2369 = vmul.f32 %v2337, %v2365
    %v2370 = vmul.f32 %v2338, %v2366
    %v2371 = vmul.f32 %v2339, %v2367
    %v2372 = vmul.f32 %v2340, %v2368
    %v2373 = vld [vmem:[%s9] sm:$0x1]
    %v2375 = vlaneseq
    %v2376 = vshrl.u32 %v2375, 7
    %v2377 = vsub.s32 0, %v2376
    %v2378 = vrot.slane %v2373, %v2377
    %v2380 = vmul.f32 %v2369, %v2378
    %v2381 = vmul.f32 %v2370, %v2378
    %v2382 = vmul.f32 %v2371, %v2378
    %v2383 = vmul.f32 %v2372, %v2378
    %v2384 = vld [vmem:[%s10] sm:$0x1]
    %v2386 = vlaneseq
    %v2387 = vshrl.u32 %v2386, 7
    %v2388 = vsub.s32 0, %v2387
    %v2389 = vrot.slane %v2384, %v2388
    %v2391 = vadd.f32 %v2380, %v2389
    %v2392 = vadd.f32 %v2381, %v2389
    %v2393 = vadd.f32 %v2382, %v2389
    %v2394 = vadd.f32 %v2383, %v2389
    %2395 = vst.msk [vmem:[#allocation11] sm:$0xff] %vm124, %v2391
    %2396 = vst.msk [vmem:[#allocation11 + $0x8] sm:$0xff] %vm124, %v2392
    %2397 = vst.msk [vmem:[#allocation11 + $0x10] sm:$0xff] %vm124, %v2393
    %2398 = vst.msk [vmem:[#allocation11 + $0x18] sm:$0xff] %vm124, %v2394
    // Predicated region
    $region66: #{tpu_custom_call.1} parent=1 // pred_check
      _
    $region67: #{tpu_custom_call.1} parent=1 // pred_check_branch
      %2400 = sbr.rel (0) target = $region69
    $region68: #{tpu_custom_call.1} parent=1 // pred_region
      %s2402 = ssub.s32 512, 512
      %2403 = vsyncadd [#allocation4], %s2402
      %s2404 = sshll.u32 [#allocation11], 4
      %s2405 = int_to_ptr.vmem [resolvable:$true] %s2404
      %2410 = dma.vmem_to_hbm [thread:$0]  %s2405, 512, %s11, [#allocation4], 128, 128, 8
    $region69: #{tpu_custom_call.1} parent=1 // pred_fallthru
      _
    // Predicated region
    $region70: #{tpu_custom_call.1} parent=1 // pred_check
      _
    $region71: #{tpu_custom_call.1} parent=1 // pred_check_branch
      %2412 = sbr.rel (0) target = $region73
    $region72: #{tpu_custom_call.1} parent=1 // pred_region
      %2413 = dma.done [#allocation4], 512
    $region73: #{tpu_custom_call.1} parent=1 // pred_fallthru
      _
    %2414 = vsyncpa [#allocation3], 1
    %2415 = vsyncpa [#allocation6], 1
    %2416 = vsyncpa [#allocation9], 1
    %2417 = vsyncpa [#allocation4], 1

</llo_original>
